<compile_context>
chip_gen: v6e
topology: v6e:2x2x1
jax: 0.10.0
libtpu: 0.0.40
codegen_flags: <defaults>
</compile_context>

<pallas_src>
import functools
from math import pi as PI

import numpy as np
import jax
import jax.numpy as jnp
from jax.experimental import pallas as pl
from jax.experimental.pallas import tpu as pltpu


# --------------------------------------------------------------------------- #
# Host-side precomputation of the (deterministic) basis constants
# --------------------------------------------------------------------------- #
def _sph_jn(order, x):
    """Spherical Bessel function j_order(x), numpy float64, upward recurrence."""
    x = np.asarray(x, dtype=np.float64)
    j0 = np.sin(x) / x
    if order == 0:
        return j0
    j1 = np.sin(x) / x**2 - np.cos(x) / x
    jm1, jcur = j0, j1
    for m in range(2, order + 1):
        jnext = (2 * m - 1) / x * jcur - jm1
        jm1, jcur = jcur, jnext
    return jcur


def _bisect(f, a, b, iters=100):
    fa = f(a)
    for _ in range(iters):
        m = 0.5 * (a + b)
        fm = f(m)
        if (fa < 0) == (fm < 0):
            a, fa = m, fm
        else:
            b = m
    return 0.5 * (a + b)


def _jn_zeros(n, k):
    """First k positive zeros of j_0 .. j_{n-1} (DimeNet interlacing construction)."""
    zerosj = np.zeros((n, k), dtype=np.float64)
    zerosj[0] = np.arange(1, k + 1) * np.pi
    points = np.arange(1, k + n) * np.pi
    for order in range(1, n):
        racines = np.zeros(k + n - 1 - order, dtype=np.float64)
        for j in range(k + n - 1 - order):
            racines[j] = _bisect(lambda u: _sph_jn(order, u), points[j], points[j + 1])
        points = racines
        zerosj[order, :k] = racines[:k]
    return zerosj


def _precompute_constants(num_spherical, num_radial, nk_pad):
    """Per-flat-column constants, padded to nk_pad rows (padding rows are inert)."""
    zeros = _jn_zeros(num_spherical, num_radial)                      # [n, k]
    norm = np.zeros_like(zeros)
    for i in range(num_spherical):
        norm[i] = 1.0 / np.sqrt(0.5 * _sph_jn(i + 1, zeros[i]) ** 2)  # bessel normalizer
    sph_coef = np.sqrt((2 * np.arange(num_spherical) + 1) / (4.0 * PI))  # Y_l^0 prefactor
    scale = norm * sph_coef[:, None]                                  # fold both norms
    nk = num_spherical * num_radial
    z_col = np.ones((nk_pad, 1), np.float32)        # pad z=1 -> finite u, no inf/NaN
    s_col = np.zeros((nk_pad, 1), np.float32)       # pad scale=0 -> padded rows emit 0
    o_col = np.full((nk_pad, 1), -1.0, np.float32)  # pad order=-1 -> never selected
    z_col[:nk, 0] = zeros.reshape(nk)
    s_col[:nk, 0] = scale.reshape(nk)
    o_col[:nk, 0] = np.repeat(np.arange(num_spherical), num_radial)
    return jnp.asarray(z_col), jnp.asarray(s_col), jnp.asarray(o_col)


# --------------------------------------------------------------------------- #
# Pallas kernel: lane-dense (transposed) evaluation of bessel * sph-harmonic
# --------------------------------------------------------------------------- #
def _sph_ang_kernel(dist_ref, angle_ref, z_ref, scale_ref, order_ref, out_ref,
                    *, num_spherical, inv_cutoff, chunk):
    nk_pad = out_ref.shape[0]
    n_chunks = out_ref.shape[1] // chunk   # block is a static multiple of chunk

    def chunk_body(ci, carry):
        col = pl.multiple_of(ci * chunk, chunk)
        x = dist_ref[:, pl.ds(col, chunk)] * inv_cutoff        # [1, C]   edges on lanes
        ang = angle_ref[:, pl.ds(col, chunk)]                  # [1, C]

        order_b = jnp.broadcast_to(order_ref[...], (nk_pad, chunk))   # hoisted broadcasts
        scale_b = jnp.broadcast_to(scale_ref[...], (nk_pad, chunk))

        # u = z_ij * dist/cutoff ; clamp so dist == 0 cannot produce 0/0 -> NaN.
        u = jnp.maximum(z_ref[...] * x, 1e-12)                 # [nk_pad, C]
        # Exact divide on purpose: approx-EUP reciprocal error is amplified by the
        # upward Bessel recurrence at high orders / small u beyond the 2e-3 tolerance.
        inv_u = 1.0 / u
        sin_u = jnp.sin(u)
        cos_u = jnp.cos(u)
        c = jnp.cos(ang)                                       # [1, C]  cos(angle)

        # order 0: j_0(u) = sin(u)/u ,  P_0 = 1
        j_prev = sin_u * inv_u
        j_sel = j_prev                                         # per-row order-selected j
        p_full = scale_b                                       # scale * P_0

        if num_spherical >= 2:
            # order 1: j_1(u) = (sin(u)/u - cos(u))/u ,  P_1 = cos(angle)
            j_curr = (j_prev - cos_u) * inv_u
            m1 = order_b == 1.0
            j_sel = jnp.where(m1, j_curr, j_sel)
            p_full = jnp.where(m1, scale_b * c, p_full)
            p_prev = jnp.ones_like(c)
            p_curr = c
            for m in range(2, num_spherical):
                # spherical Bessel + Legendre upward recurrences
                j_next = (2.0 * m - 1.0) * inv_u * j_curr - j_prev
                p_next = ((2.0 * m - 1.0) * c * p_curr
                          - (m - 1.0) * p_prev) * (1.0 / m)     # [1, C], 1 vreg
                mm = order_b == float(m)
                j_sel = jnp.where(mm, j_next, j_sel)            # 1 select / order
                p_full = jnp.where(mm, scale_b * p_next, p_full)
                j_prev, j_curr = j_curr, j_next
                p_prev, p_curr = p_curr, p_next

        # single final multiply; lane-dense (128-wide) store
        out_ref[:, pl.ds(col, chunk)] = (j_sel * p_full).astype(out_ref.dtype)
        return carry

    jax.lax.fori_loop(0, n_chunks, chunk_body, 0)


# --------------------------------------------------------------------------- #
# Wrapper
# --------------------------------------------------------------------------- #
def spherical_angular_encoding(dist, angle, idx_kj=None, *,
                               num_spherical, num_radial, cutoff=5.0,
                               block_rows=2048, chunk=128, transposed_output=False):
    assert num_radial <= 64
    assert chunk % 128 == 0 and block_rows % chunk == 0
    nk = num_spherical * num_radial
    nk_pad = ((nk + 7) // 8) * 8                     # sublane-aligned compute width
    z_col, scale_col, order_col = _precompute_constants(num_spherical, num_radial, nk_pad)

    dist = jnp.asarray(dist, jnp.float32)
    angle = jnp.asarray(angle, jnp.float32)
    if idx_kj is not None:
        # rbf[idx_kj] in the reference == evaluating rbf on gathered distances.
        # TODO(synk): fuse this gather into the kernel (scalar prefetch + manual DMA).
        dist = dist[jnp.asarray(idx_kj)]

    n_rows = dist.shape[0]
    assert angle.shape[0] == n_rows

    # Big grid tiles (amortize per-step overhead) but never bigger than the padded input.
    block = min(block_rows, pl.cdiv(n_rows, chunk) * chunk)
    n_pad = pl.cdiv(n_rows, block) * block
    pad = n_pad - n_rows
    d2 = jnp.pad(dist, (0, pad), constant_values=1.0).reshape(1, n_pad)
    a2 = jnp.pad(angle, (0, pad), constant_values=0.0).reshape(1, n_pad)

    out_t = pl.pallas_call(
        functools.partial(_sph_ang_kernel,
                          num_spherical=num_spherical,
                          inv_cutoff=1.0 / cutoff,
                          chunk=chunk),
        out_shape=jax.ShapeDtypeStruct((nk_pad, n_pad), jnp.float32),
        grid=(n_pad // block,),
        in_specs=[
            pl.BlockSpec((1, block), lambda i: (0, i)),        # dist  (edges on lanes)
            pl.BlockSpec((1, block), lambda i: (0, i)),        # angle (edges on lanes)
            pl.BlockSpec((nk_pad, 1), lambda i: (0, 0)),       # bessel zeros per column
            pl.BlockSpec((nk_pad, 1), lambda i: (0, 0)),       # fused normalizers per column
            pl.BlockSpec((nk_pad, 1), lambda i: (0, 0)),       # spherical order per column
        ],
        out_specs=pl.BlockSpec((nk_pad, block), lambda i: (0, i)),
        compiler_params=pltpu.CompilerParams(dimension_semantics=("parallel",)),
    )(d2, a2, z_col, scale_col, order_col)

    if transposed_output:
        # [nk, N] layout for downstream fusion — no extra HBM pass.
        return out_t[:nk, :n_rows]
    # Module-contract layout [N, num_spherical*num_radial] (cheap XLA transpose+slice).
    return jnp.transpose(out_t)[:n_rows, :nk]


# --------------------------------------------------------------------------- #
# Pure-numpy float64 reference (mirrors the torch/sympy forward semantics)
# --------------------------------------------------------------------------- #
def _reference(dist, angle, num_spherical, num_radial, cutoff):
    dist = np.asarray(dist, np.float64) / cutoff
    angle = np.asarray(angle, np.float64)
    zeros = _jn_zeros(num_spherical, num_radial)
    n = dist.shape[0]
    out = np.zeros((n, num_spherical * num_radial))
    c = np.cos(angle)
    for i in range(num_spherical):
        p = np.polynomial.legendre.legval(c, np.eye(num_spherical)[i])   # P_i(cos angle)
        y = np.sqrt((2 * i + 1) / (4.0 * PI)) * p
        for j in range(num_radial):
            z = zeros[i, j]
            norm = 1.0 / np.sqrt(0.5 * _sph_jn(i + 1, z) ** 2)
            out[:, i * num_radial + j] = norm * _sph_jn(i, z * dist) * y
    return out


if __name__ == "__main__":
    num_spherical, num_radial, cutoff = 7, 6, 5.0
    n_edges = 200

    key = jax.random.PRNGKey(0)
    k1, k2 = jax.random.split(key)
    dist = jax.random.uniform(k1, (n_edges,), jnp.float32, 0.5, cutoff)
    angle = jax.random.uniform(k2, (n_edges,), jnp.float32, 0.0, PI)

    out = spherical_angular_encoding(dist, angle,
                                     num_spherical=num_spherical,
                                     num_radial=num_radial,
                                     cutoff=cutoff)
    out = jax.block_until_ready(out)

    ref = _reference(np.asarray(dist), np.asarray(angle),
                     num_spherical, num_radial, cutoff)
    np.testing.assert_allclose(np.asarray(out), ref, rtol=2e-3, atol=2e-3)
    assert out.shape == (n_edges, num_spherical * num_radial)
    print("KERNEL_OK")
</pallas_src>

<mosaic_0001>
module attributes {stable_mosaic.version = 11 : i64} {
  func.func @_sph_ang_kernel(%arg0: i32, %arg1: memref<1x256xf32, #tpu.memory_space<vmem>>, %arg2: memref<1x256xf32, #tpu.memory_space<vmem>>, %arg3: memref<48x1xf32, #tpu.memory_space<vmem>>, %arg4: memref<48x1xf32, #tpu.memory_space<vmem>>, %arg5: memref<48x1xf32, #tpu.memory_space<vmem>>, %arg6: memref<48x256xf32, #tpu.memory_space<vmem>>) attributes {dimension_semantics = [#tpu.dimension_semantics<parallel>], iteration_bounds = array<i64: 1>, scalar_prefetch = 0 : i64, scratch_operands = 0 : i64, tpu.core_type = #tpu.core_type<tc>, window_params = [{transform_indices = @transform_0, window_bounds = array<i64: 1, 256>}, {transform_indices = @transform_1, window_bounds = array<i64: 1, 256>}, {pipeline_mode = #tpu.pipeline_mode<synchronous>, transform_indices = @transform_2, window_bounds = array<i64: 48, 1>}, {pipeline_mode = #tpu.pipeline_mode<synchronous>, transform_indices = @transform_3, window_bounds = array<i64: 48, 1>}, {pipeline_mode = #tpu.pipeline_mode<synchronous>, transform_indices = @transform_4, window_bounds = array<i64: 48, 1>}, {transform_indices = @transform_5, window_bounds = array<i64: 48, 256>}]} {
    %c0_i32 = arith.constant 0 : i32
    %c2_i32 = arith.constant 2 : i32
    %0 = arith.addi %c0_i32, %c2_i32 : i32
    %c1_i32 = arith.constant 1 : i32
    scf.for %arg7 = %c0_i32 to %0 step %c1_i32  : i32 {
      %c128_i32 = arith.constant 128 : i32
      %1 = arith.muli %arg7, %c128_i32 : i32
      %2 = tpu.assume_multiple %1, 128 : i32
      %c0 = arith.constant 0 : index
      %3 = arith.index_cast %2 : i32 to index
      %4 = vector.load %arg1[%c0, %3] : memref<1x256xf32, #tpu.memory_space<vmem>>, vector<1x128xf32>
      %cst = arith.constant 2.000000e-01 : f32
      %5 = vector.broadcast %cst : f32 to vector<1x128xf32>
      %6 = arith.mulf %4, %5 : vector<1x128xf32>
      %c0_1 = arith.constant 0 : index
      %7 = arith.index_cast %2 : i32 to index
      %8 = vector.load %arg2[%c0_1, %7] : memref<1x256xf32, #tpu.memory_space<vmem>>, vector<1x128xf32>
      %c0_2 = arith.constant 0 : index
      %c0_3 = arith.constant 0 : index
      %9 = vector.load %arg5[%c0_2, %c0_3] : memref<48x1xf32, #tpu.memory_space<vmem>>, vector<48x1xf32>
      %10 = vector.shape_cast %9 : vector<48x1xf32> to vector<48x1xf32>
      %11 = vector.broadcast %10 : vector<48x1xf32> to vector<48x128xf32>
      %c0_4 = arith.constant 0 : index
      %c0_5 = arith.constant 0 : index
      %12 = vector.load %arg4[%c0_4, %c0_5] : memref<48x1xf32, #tpu.memory_space<vmem>>, vector<48x1xf32>
      %13 = vector.shape_cast %12 : vector<48x1xf32> to vector<48x1xf32>
      %14 = vector.broadcast %13 : vector<48x1xf32> to vector<48x128xf32>
      %c0_6 = arith.constant 0 : index
      %c0_7 = arith.constant 0 : index
      %15 = vector.load %arg3[%c0_6, %c0_7] : memref<48x1xf32, #tpu.memory_space<vmem>>, vector<48x1xf32>
      %16 = vector.broadcast %15 : vector<48x1xf32> to vector<48x128xf32>
      %17 = vector.broadcast %6 : vector<1x128xf32> to vector<48x128xf32>
      %18 = arith.mulf %16, %17 : vector<48x128xf32>
      %cst_8 = arith.constant 9.99999996E-13 : f32
      %19 = vector.broadcast %cst_8 : f32 to vector<48x128xf32>
      %20 = arith.maximumf %18, %19 : vector<48x128xf32>
      %cst_9 = arith.constant 1.000000e+00 : f32
      %21 = vector.broadcast %cst_9 : f32 to vector<48x128xf32>
      %22 = arith.divf %21, %20 : vector<48x128xf32>
      %23 = math.sin %20 : vector<48x128xf32>
      %24 = math.cos %20 : vector<48x128xf32>
      %25 = math.cos %8 : vector<1x128xf32>
      %26 = arith.mulf %23, %22 : vector<48x128xf32>
      %27 = arith.subf %26, %24 : vector<48x128xf32>
      %28 = arith.mulf %27, %22 : vector<48x128xf32>
      %cst_10 = arith.constant 1.000000e+00 : f32
      %29 = vector.broadcast %cst_10 : f32 to vector<48x128xf32>
      %30 = arith.cmpf oeq, %11, %29 : vector<48x128xf32>
      %31 = arith.select %30, %28, %26 : vector<48x128xi1>, vector<48x128xf32>
      %32 = vector.broadcast %25 : vector<1x128xf32> to vector<48x128xf32>
      %33 = arith.mulf %14, %32 : vector<48x128xf32>
      %34 = arith.select %30, %33, %14 : vector<48x128xi1>, vector<48x128xf32>
      %cst_11 = arith.constant 1.000000e+00 : f32
      %35 = vector.broadcast %cst_11 : f32 to vector<1x128xf32>
      %cst_12 = arith.constant 3.000000e+00 : f32
      %36 = vector.broadcast %cst_12 : f32 to vector<48x128xf32>
      %37 = arith.mulf %36, %22 : vector<48x128xf32>
      %38 = arith.mulf %37, %28 : vector<48x128xf32>
      %39 = arith.subf %38, %26 : vector<48x128xf32>
      %cst_13 = arith.constant 3.000000e+00 : f32
      %40 = vector.broadcast %cst_13 : f32 to vector<1x128xf32>
      %41 = arith.mulf %40, %25 : vector<1x128xf32>
      %42 = arith.mulf %41, %25 : vector<1x128xf32>
      %cst_14 = arith.constant 1.000000e+00 : f32
      %43 = vector.broadcast %cst_14 : f32 to vector<1x128xf32>
      %44 = arith.mulf %43, %35 : vector<1x128xf32>
      %45 = arith.subf %42, %44 : vector<1x128xf32>
      %cst_15 = arith.constant 5.000000e-01 : f32
      %46 = vector.broadcast %cst_15 : f32 to vector<1x128xf32>
      %47 = arith.mulf %45, %46 : vector<1x128xf32>
      %cst_16 = arith.constant 2.000000e+00 : f32
      %48 = vector.broadcast %cst_16 : f32 to vector<48x128xf32>
      %49 = arith.cmpf oeq, %11, %48 : vector<48x128xf32>
      %50 = arith.select %49, %39, %31 : vector<48x128xi1>, vector<48x128xf32>
      %51 = vector.broadcast %47 : vector<1x128xf32> to vector<48x128xf32>
      %52 = arith.mulf %14, %51 : vector<48x128xf32>
      %53 = arith.select %49, %52, %34 : vector<48x128xi1>, vector<48x128xf32>
      %cst_17 = arith.constant 5.000000e+00 : f32
      %54 = vector.broadcast %cst_17 : f32 to vector<48x128xf32>
      %55 = arith.mulf %54, %22 : vector<48x128xf32>
      %56 = arith.mulf %55, %39 : vector<48x128xf32>
      %57 = arith.subf %56, %28 : vector<48x128xf32>
      %cst_18 = arith.constant 5.000000e+00 : f32
      %58 = vector.broadcast %cst_18 : f32 to vector<1x128xf32>
      %59 = arith.mulf %58, %25 : vector<1x128xf32>
      %60 = arith.mulf %59, %47 : vector<1x128xf32>
      %cst_19 = arith.constant 2.000000e+00 : f32
      %61 = vector.broadcast %cst_19 : f32 to vector<1x128xf32>
      %62 = arith.mulf %61, %25 : vector<1x128xf32>
      %63 = arith.subf %60, %62 : vector<1x128xf32>
      %cst_20 = arith.constant 0.333333343 : f32
      %64 = vector.broadcast %cst_20 : f32 to vector<1x128xf32>
      %65 = arith.mulf %63, %64 : vector<1x128xf32>
      %cst_21 = arith.constant 3.000000e+00 : f32
      %66 = vector.broadcast %cst_21 : f32 to vector<48x128xf32>
      %67 = arith.cmpf oeq, %11, %66 : vector<48x128xf32>
      %68 = arith.select %67, %57, %50 : vector<48x128xi1>, vector<48x128xf32>
      %69 = vector.broadcast %65 : vector<1x128xf32> to vector<48x128xf32>
      %70 = arith.mulf %14, %69 : vector<48x128xf32>
      %71 = arith.select %67, %70, %53 : vector<48x128xi1>, vector<48x128xf32>
      %cst_22 = arith.constant 7.000000e+00 : f32
      %72 = vector.broadcast %cst_22 : f32 to vector<48x128xf32>
      %73 = arith.mulf %72, %22 : vector<48x128xf32>
      %74 = arith.mulf %73, %57 : vector<48x128xf32>
      %75 = arith.subf %74, %39 : vector<48x128xf32>
      %cst_23 = arith.constant 7.000000e+00 : f32
      %76 = vector.broadcast %cst_23 : f32 to vector<1x128xf32>
      %77 = arith.mulf %76, %25 : vector<1x128xf32>
      %78 = arith.mulf %77, %65 : vector<1x128xf32>
      %cst_24 = arith.constant 3.000000e+00 : f32
      %79 = vector.broadcast %cst_24 : f32 to vector<1x128xf32>
      %80 = arith.mulf %79, %47 : vector<1x128xf32>
      %81 = arith.subf %78, %80 : vector<1x128xf32>
      %cst_25 = arith.constant 2.500000e-01 : f32
      %82 = vector.broadcast %cst_25 : f32 to vector<1x128xf32>
      %83 = arith.mulf %81, %82 : vector<1x128xf32>
      %cst_26 = arith.constant 4.000000e+00 : f32
      %84 = vector.broadcast %cst_26 : f32 to vector<48x128xf32>
      %85 = arith.cmpf oeq, %11, %84 : vector<48x128xf32>
      %86 = arith.select %85, %75, %68 : vector<48x128xi1>, vector<48x128xf32>
      %87 = vector.broadcast %83 : vector<1x128xf32> to vector<48x128xf32>
      %88 = arith.mulf %14, %87 : vector<48x128xf32>
      %89 = arith.select %85, %88, %71 : vector<48x128xi1>, vector<48x128xf32>
      %cst_27 = arith.constant 9.000000e+00 : f32
      %90 = vector.broadcast %cst_27 : f32 to vector<48x128xf32>
      %91 = arith.mulf %90, %22 : vector<48x128xf32>
      %92 = arith.mulf %91, %75 : vector<48x128xf32>
      %93 = arith.subf %92, %57 : vector<48x128xf32>
      %cst_28 = arith.constant 9.000000e+00 : f32
      %94 = vector.broadcast %cst_28 : f32 to vector<1x128xf32>
      %95 = arith.mulf %94, %25 : vector<1x128xf32>
      %96 = arith.mulf %95, %83 : vector<1x128xf32>
      %cst_29 = arith.constant 4.000000e+00 : f32
      %97 = vector.broadcast %cst_29 : f32 to vector<1x128xf32>
      %98 = arith.mulf %97, %65 : vector<1x128xf32>
      %99 = arith.subf %96, %98 : vector<1x128xf32>
      %cst_30 = arith.constant 2.000000e-01 : f32
      %100 = vector.broadcast %cst_30 : f32 to vector<1x128xf32>
      %101 = arith.mulf %99, %100 : vector<1x128xf32>
      %cst_31 = arith.constant 5.000000e+00 : f32
      %102 = vector.broadcast %cst_31 : f32 to vector<48x128xf32>
      %103 = arith.cmpf oeq, %11, %102 : vector<48x128xf32>
      %104 = arith.select %103, %93, %86 : vector<48x128xi1>, vector<48x128xf32>
      %105 = vector.broadcast %101 : vector<1x128xf32> to vector<48x128xf32>
      %106 = arith.mulf %14, %105 : vector<48x128xf32>
      %107 = arith.select %103, %106, %89 : vector<48x128xi1>, vector<48x128xf32>
      %cst_32 = arith.constant 1.100000e+01 : f32
      %108 = vector.broadcast %cst_32 : f32 to vector<48x128xf32>
      %109 = arith.mulf %108, %22 : vector<48x128xf32>
      %110 = arith.mulf %109, %93 : vector<48x128xf32>
      %111 = arith.subf %110, %75 : vector<48x128xf32>
      %cst_33 = arith.constant 1.100000e+01 : f32
      %112 = vector.broadcast %cst_33 : f32 to vector<1x128xf32>
      %113 = arith.mulf %112, %25 : vector<1x128xf32>
      %114 = arith.mulf %113, %101 : vector<1x128xf32>
      %cst_34 = arith.constant 5.000000e+00 : f32
      %115 = vector.broadcast %cst_34 : f32 to vector<1x128xf32>
      %116 = arith.mulf %115, %83 : vector<1x128xf32>
      %117 = arith.subf %114, %116 : vector<1x128xf32>
      %cst_35 = arith.constant 0.166666672 : f32
      %118 = vector.broadcast %cst_35 : f32 to vector<1x128xf32>
      %119 = arith.mulf %117, %118 : vector<1x128xf32>
      %cst_36 = arith.constant 6.000000e+00 : f32
      %120 = vector.broadcast %cst_36 : f32 to vector<48x128xf32>
      %121 = arith.cmpf oeq, %11, %120 : vector<48x128xf32>
      %122 = arith.select %121, %111, %104 : vector<48x128xi1>, vector<48x128xf32>
      %123 = vector.broadcast %119 : vector<1x128xf32> to vector<48x128xf32>
      %124 = arith.mulf %14, %123 : vector<48x128xf32>
      %125 = arith.select %121, %124, %107 : vector<48x128xi1>, vector<48x128xf32>
      %126 = arith.mulf %122, %125 : vector<48x128xf32>
      %c0_37 = arith.constant 0 : index
      %127 = arith.index_cast %2 : i32 to index
      %128 = vector.load %arg6[%c0_37, %127] : memref<48x256xf32, #tpu.memory_space<vmem>>, vector<48x128xf32>
      tpu.vector_store %arg6[%c0_37, %127], %126 {strides = array<i32>} : memref<48x256xf32, #tpu.memory_space<vmem>>, vector<48x128xf32>,
    }
    %c2_i32_0 = arith.constant 2 : i32
    return
  }
  func.func @transform_0(%arg0: i32) -> (i32, i32) {
    %c0_i32 = arith.constant 0 : i32
    %c0_i32_0 = arith.constant 0 : i32
    return %c0_i32, %arg0 : i32, i32
  }
  func.func @transform_1(%arg0: i32) -> (i32, i32) {
    %c0_i32 = arith.constant 0 : i32
    %c0_i32_0 = arith.constant 0 : i32
    return %c0_i32, %arg0 : i32, i32
  }
  func.func @transform_2(%arg0: i32) -> (i32, i32) {
    %c0_i32 = arith.constant 0 : i32
    %c0_i32_0 = arith.constant 0 : i32
    %c0_i32_1 = arith.constant 0 : i32
    return %c0_i32, %c0_i32_0 : i32, i32
  }
  func.func @transform_3(%arg0: i32) -> (i32, i32) {
    %c0_i32 = arith.constant 0 : i32
    %c0_i32_0 = arith.constant 0 : i32
    %c0_i32_1 = arith.constant 0 : i32
    return %c0_i32, %c0_i32_0 : i32, i32
  }
  func.func @transform_4(%arg0: i32) -> (i32, i32) {
    %c0_i32 = arith.constant 0 : i32
    %c0_i32_0 = arith.constant 0 : i32
    %c0_i32_1 = arith.constant 0 : i32
    return %c0_i32, %c0_i32_0 : i32, i32
  }
  func.func @transform_5(%arg0: i32) -> (i32, i32) {
    %c0_i32 = arith.constant 0 : i32
    %c0_i32_0 = arith.constant 0 : i32
    return %c0_i32, %arg0 : i32, i32
  }
}

</mosaic_0001>

<llo_original>
// kernel: tpu_custom_call.1
$region0: #{tpu_custom_call.1}
  #allocation0 [shape = 'u32[]', space=smem, size = 0x4, offset = 0x4, fixed_abs, tag = 'smem constant byte address 0x4 - core index']
  #allocation1 [shape = 'u32[144,128]{1,0:T(1,128)}', space=vmem, size = 0x12000, scoped, tag = 'internal scratch']
  %s0 = inlined_call_operand.vmem [shape: f32[1,256], index: 0, kind: input, shape index: {}]
  %s1 = inlined_call_operand.vmem [shape: f32[1,256], index: 1, kind: input, shape index: {}]
  %s2 = inlined_call_operand.vmem [shape: f32[48,1], index: 2, kind: input, shape index: {}]
  %s3 = inlined_call_operand.vmem [shape: f32[48,1], index: 3, kind: input, shape index: {}]
  %s4 = inlined_call_operand.vmem [shape: f32[48,1], index: 4, kind: input, shape index: {}]
  %s5 = inlined_call_operand.hbm [shape: f32[48,256], index: 5, kind: output, shape index: {}]
  %s6 = sld [smem:[#allocation0]]
  $region37: #{tpu_custom_call.1} parent=0
    _
  %s8 = ssub.s32 1, %s6
  %s9 = scalar_select 0, %s8, %s6
  $region1: #{tpu_custom_call.1} parent=0
    #allocation2 [shape = 'u8[49152]{0}', space=vmem, size = 0xc000, scoped, tag = 'output window, operand 0, single buffered']
    #allocation3 [shape = 's32[1]{0}', space=sflag, size = 0x4, scoped, tag = 'scoped memory for tpu_custom_call.1']
    %10 = vsyncpa [#allocation3], 0
    // Predicated region
    $region2: #{tpu_custom_call.1} parent=1 // pred_check
      _
    $region3: #{tpu_custom_call.1} parent=1 // pred_check_branch
      %12 = sbr.rel (0) target = $region5
    $region4: #{tpu_custom_call.1} parent=1 // pred_region
      _
    $region5: #{tpu_custom_call.1} parent=1 // pred_fallthru
      _
    // Predicated region
    $region6: #{tpu_custom_call.1} parent=1 // pred_check
      _
    $region7: #{tpu_custom_call.1} parent=1 // pred_check_branch
      %14 = sbr.rel (0) target = $region9
    $region8: #{tpu_custom_call.1} parent=1 // pred_region
      _
    $region9: #{tpu_custom_call.1} parent=1 // pred_fallthru
      _
    // Predicated region
    $region10: #{tpu_custom_call.1} parent=1 // pred_check
      _
    $region11: #{tpu_custom_call.1} parent=1 // pred_check_branch
      %16 = sbr.rel (0) target = $region13
    $region12: #{tpu_custom_call.1} parent=1 // pred_region
      _
    $region13: #{tpu_custom_call.1} parent=1 // pred_fallthru
      _
    // Predicated region
    $region14: #{tpu_custom_call.1} parent=1 // pred_check
      _
    $region15: #{tpu_custom_call.1} parent=1 // pred_check_branch
      %18 = sbr.rel (0) target = $region17
    $region16: #{tpu_custom_call.1} parent=1 // pred_region
      _
    $region17: #{tpu_custom_call.1} parent=1 // pred_fallthru
      _
    // Predicated region
    $region18: #{tpu_custom_call.1} parent=1 // pred_check
      _
    $region19: #{tpu_custom_call.1} parent=1 // pred_check_branch
      %20 = sbr.rel (0) target = $region21
    $region20: #{tpu_custom_call.1} parent=1 // pred_region
      _
    $region21: #{tpu_custom_call.1} parent=1 // pred_fallthru
      _
    loop: start=0, step=1, limit=2
    $region22: #{tpu_custom_call.1} parent=1 // loop_pre_header
      _
    $region23: #{tpu_custom_call.1} parent=1 // loop_header
      %s22 = sphi 0, %s26
      %p23 = scmp.ge.s32.totalorder %s22, 2
    $region24: #{tpu_custom_call.1} parent=1 // loop_header_branch
      %25 = sbr.rel (%p23) target = $region28
    $region25: #{tpu_custom_call.1} parent=1 // loop_body
      %s27 = smul.u32 %s22, 128
      %s28 = sshra.s32 %s27, 7
      %s29 = sand.u32 %s27, 127
      %s30 = scalar_lea.vmem %s0, %s28
      %v31 = vld [vmem:[%s30] sm:$0x1]
      %v32 = vmul.f32 %v31, 0.2
      %s33 = scalar_lea.vmem %s1, %s28
      %v34 = vld [vmem:[%s33] sm:$0x1]
      %v35 = vld [vmem:[%s4] sm:$0xff]
      %v36 = vld [vmem:[%s4 + $0x8] sm:$0xff]
      %v37 = vld [vmem:[%s4 + $0x10] sm:$0xff]
      %v38 = vld [vmem:[%s4 + $0x18] sm:$0xff]
      %v39 = vld [vmem:[%s4 + $0x20] sm:$0xff]
      %v40 = vld [vmem:[%s4 + $0x28] sm:$0xff]
      %42 = vset.pattern.permute.xlu0 0
      %43 = vperm.xlu0 %42, %v35
      %v44 = vpop.permute.xlu0 %43
      %47 = vset.pattern.permute.xlu0 0
      %48 = vperm.xlu0 %47, %v36
      %v49 = vpop.permute.xlu0 %48
      %52 = vset.pattern.permute.xlu0 0
      %53 = vperm.xlu0 %52, %v37
      %v54 = vpop.permute.xlu0 %53
      %57 = vset.pattern.permute.xlu0 0
      %58 = vperm.xlu0 %57, %v38
      %v59 = vpop.permute.xlu0 %58
      %62 = vset.pattern.permute.xlu0 0
      %63 = vperm.xlu0 %62, %v39
      %v64 = vpop.permute.xlu0 %63
      %67 = vset.pattern.permute.xlu0 0
      %68 = vperm.xlu0 %67, %v40
      %v69 = vpop.permute.xlu0 %68
      %v71 = vld [vmem:[%s3] sm:$0xff]
      %v72 = vld [vmem:[%s3 + $0x8] sm:$0xff]
      %v73 = vld [vmem:[%s3 + $0x10] sm:$0xff]
      %v74 = vld [vmem:[%s3 + $0x18] sm:$0xff]
      %v75 = vld [vmem:[%s3 + $0x20] sm:$0xff]
      %v76 = vld [vmem:[%s3 + $0x28] sm:$0xff]
      %78 = vset.pattern.permute.xlu0 0
      %79 = vperm.xlu0 %78, %v71
      %v80 = vpop.permute.xlu0 %79
      %83 = vset.pattern.permute.xlu0 0
      %84 = vperm.xlu0 %83, %v72
      %v85 = vpop.permute.xlu0 %84
      %88 = vset.pattern.permute.xlu0 0
      %89 = vperm.xlu0 %88, %v73
      %v90 = vpop.permute.xlu0 %89
      %93 = vset.pattern.permute.xlu0 0
      %94 = vperm.xlu0 %93, %v74
      %v95 = vpop.permute.xlu0 %94
      %98 = vset.pattern.permute.xlu0 0
      %99 = vperm.xlu0 %98, %v75
      %v100 = vpop.permute.xlu0 %99
      %103 = vset.pattern.permute.xlu0 0
      %104 = vperm.xlu0 %103, %v76
      %v105 = vpop.permute.xlu0 %104
      %v107 = vld [vmem:[%s2] sm:$0xff]
      %v108 = vld [vmem:[%s2 + $0x8] sm:$0xff]
      %v109 = vld [vmem:[%s2 + $0x10] sm:$0xff]
      %v110 = vld [vmem:[%s2 + $0x18] sm:$0xff]
      %v111 = vld [vmem:[%s2 + $0x20] sm:$0xff]
      %v112 = vld [vmem:[%s2 + $0x28] sm:$0xff]
      %114 = vset.pattern.permute.xlu0 0
      %115 = vperm.xlu0 %114, %v107
      %v116 = vpop.permute.xlu0 %115
      %119 = vset.pattern.permute.xlu0 0
      %120 = vperm.xlu0 %119, %v108
      %v121 = vpop.permute.xlu0 %120
      %124 = vset.pattern.permute.xlu0 0
      %125 = vperm.xlu0 %124, %v109
      %v126 = vpop.permute.xlu0 %125
      %129 = vset.pattern.permute.xlu0 0
      %130 = vperm.xlu0 %129, %v110
      %v131 = vpop.permute.xlu0 %130
      %134 = vset.pattern.permute.xlu0 0
      %135 = vperm.xlu0 %134, %v111
      %v136 = vpop.permute.xlu0 %135
      %139 = vset.pattern.permute.xlu0 0
      %140 = vperm.xlu0 %139, %v112
      %v141 = vpop.permute.xlu0 %140
      %v144 = vlaneseq
      %v145 = vshrl.u32 %v144, 7
      %v146 = vsub.s32 0, %v145
      %v147 = vrot.slane %v32, %v146
      %v149 = vmul.f32 %v116, %v147
      %v150 = vmul.f32 %v121, %v147
      %v151 = vmul.f32 %v126, %v147
      %v152 = vmul.f32 %v131, %v147
      %v153 = vmul.f32 %v136, %v147
      %v154 = vmul.f32 %v141, %v147
      %v155 = vmax.f32 %v149, 1e-12
      %v156 = vmax.f32 %v150, 1e-12
      %v157 = vmax.f32 %v151, 1e-12
      %v158 = vmax.f32 %v152, 1e-12
      %v159 = vmax.f32 %v153, 1e-12
      %v160 = vmax.f32 %v154, 1e-12
      %v161 = vrcp.pop %v155
      %v162 = vmul.f32 1.0, %v161
      %v163 = vrcp.pop %v156
      %v164 = vmul.f32 1.0, %v163
      %v165 = vrcp.pop %v157
      %v166 = vmul.f32 1.0, %v165
      %v167 = vrcp.pop %v158
      %v168 = vmul.f32 1.0, %v167
      %v169 = vrcp.pop %v159
      %v170 = vmul.f32 1.0, %v169
      %v171 = vrcp.pop %v160
      %v172 = vmul.f32 1.0, %v171
      %v173 = vand.u32 2147483647, %v155
      %vm174 = vcmp.le.f32.partialorder %v173, 0.7853982
      %vm175 = vcmp.lt.s32.totalorder %v155, 0
      %v176 = vand.u32 %v155, 2139095040
      %v177 = vshrl.u32 %v176, 23
      %v178 = vsub.s32 %v177, 127
      %v179 = vand.u32 2147483647, %v155
      %v180 = vand.u32 %v179, 8388607
      %v181 = vor.u32 %v180, 8388608
      %v182 = vsub.s32 0, %v181
      %v183 = vadd.s32 %v178, 1
      %vm184 = vcmp.gt.s32.totalorder %v183, 0
      %v185 = vsel %vm184, %v183, 0
      %v186 = vshrl.u32 %v185, 5
      %v187 = vand.u32 %v185, 31
      %v188 = vsub.s32 32, %v187
      %v189 = vshrl.u32 683565275, %v188
      %v190 = vshll.u32 683565275, %v187
      %v191 = vshrl.u32 2475754826, %v188
      %v192 = vor.u32 %v190, %v191
      %v193 = vshll.u32 2475754826, %v187
      %v194 = vshrl.u32 2131351028, %v188
      %v195 = vor.u32 %v193, %v194
      %v196 = vshll.u32 2131351028, %v187
      %v197 = vshrl.u32 2102212464, %v188
      %v198 = vor.u32 %v196, %v197
      %v199 = vshll.u32 2102212464, %v187
      %v200 = vshrl.u32 920167782, %v188
      %v201 = vor.u32 %v199, %v200
      %v202 = vshll.u32 920167782, %v187
      %v203 = vshrl.u32 1326507024, %v188
      %v204 = vor.u32 %v202, %v203
      %vm205 = vcmp.lt.s32.totalorder %v186, 1
      %vm206 = vcmp.lt.s32.totalorder %v186, 2
      %vm207 = vcmp.lt.s32.totalorder %v186, 3
      %vm208 = vcmp.lt.s32.totalorder %v186, 4
      %v209 = vsel %vm205, %v189, %v192
      %v210 = vsel %vm208, %v198, 2102212464
      %v211 = vsel %vm207, %v195, %v210
      %v212 = vsel %vm206, %v209, %v211
      %v213 = vsel %vm205, %v192, %v195
      %v214 = vsel %vm208, %v201, 920167782
      %v215 = vsel %vm207, %v198, %v214
      %v216 = vsel %vm206, %v213, %v215
      %v217 = vsel %vm205, %v195, %v198
      %v218 = vsel %vm208, %v204, 1326507024
      %v219 = vsel %vm207, %v201, %v218
      %v220 = vsel %vm206, %v217, %v219
      %v221 = vshll.u32 %v181, 8
      %v222 = vmul.u32.u64.compose %v221, %v220
      %v223 = vextract.low.u32 %v222
      %v224 = vextract.high.u32 %v222
      %v225 = vmul.u32.u64.compose %v221, %v216
      %v226 = vextract.low.u32 %v225
      %v227 = vextract.high.u32 %v225
      %v228 = vmul.u32 %v221, %v212
      %v229 = vadd.s32 %v224, %v226
      %vm230 = vc.u32 %v224, %v226
      %v231 = vadd.s32 %v227, 1
      %v232 = vsel %vm230, %v231, %v227
      %v233 = vadd.s32 %v228, %v232
      %v234 = vadd.s32 %v233, 536870912
      %v235 = vshrl.u32 %v234, 30
      %v236 = vshll.u32 %v235, 30
      %v237 = vsub.s32 %v233, %v236
      %vm238 = vcmp.lt.s32.totalorder %v237, 0
      %v239 = vsub.s32 0, %v237
      %v240 = vsel %vm238, %v239, %v237
      %v241 = vclz %v240
      %v242 = vsub.s32 %v241, 2
      %vm243 = vcmp.gt.s32.totalorder 0, %v242
      %v244 = vsel %vm243, 0, %v242
      %v245 = vsub.s32 32, %v244
      %v246 = vshll.u32 %v237, %v244
      %v247 = vshrl.u32 %v229, %v245
      %v248 = vor.u32 %v246, %v247
      %v249 = vsub.s32 4294967266, %v244
      %v250 = vadd.s32 %v249, 127
      %v251 = vshll.u32 %v250, 23
      %v252 = vor.u32 4788187, %v251
      %v253 = vand.u32 2147483647, %v252
      %v255 = vcvt.s32.f32 %v248
      %v256 = vmul.f32 %v255, %v253
      %v257 = vxor.u32 %v256, 2147483648
      %v258 = vsel %vm175, %v257, %v256
      %v259 = vsub.s32 4, %v235
      %v260 = vsel %vm175, %v259, %v235
      %v261 = vsel %vm174, %v155, %v258
      %v262 = vsel %vm174, 0, %v260
      %v263 = vcosq.f32.pop %v261
      %v264 = vsinq.f32.pop %v261
      %vm265 = vweird.f32 %v155
      %v266 = vadd.s32 %v262, 3
      %v267 = vand.u32 %v266, 3
      %vm268 = vcmp.lt.s32.totalorder %v267, 2
      %vm269 = vcmp.eq.s32.totalorder %v267, 0
      %v270 = vxor.u32 %v264, 2147483648
      %v271 = vsel %vm269, %v263, %v270
      %vm272 = vcmp.eq.s32.totalorder %v267, 2
      %v273 = vxor.u32 %v263, 2147483648
      %v274 = vsel %vm272, %v273, %v264
      %v275 = vsel %vm268, %v271, %v274
      %v276 = vsel %vm265, nan, %v275
      %v277 = vand.u32 2147483647, %v156
      %vm278 = vcmp.le.f32.partialorder %v277, 0.7853982
      %vm279 = vcmp.lt.s32.totalorder %v156, 0
      %v280 = vand.u32 %v156, 2139095040
      %v281 = vshrl.u32 %v280, 23
      %v282 = vsub.s32 %v281, 127
      %v283 = vand.u32 2147483647, %v156
      %v284 = vand.u32 %v283, 8388607
      %v285 = vor.u32 %v284, 8388608
      %v286 = vsub.s32 0, %v285
      %v287 = vadd.s32 %v282, 1
      %vm288 = vcmp.gt.s32.totalorder %v287, 0
      %v289 = vsel %vm288, %v287, 0
      %v290 = vshrl.u32 %v289, 5
      %v291 = vand.u32 %v289, 31
      %v292 = vsub.s32 32, %v291
      %v293 = vshrl.u32 683565275, %v292
      %v294 = vshll.u32 683565275, %v291
      %v295 = vshrl.u32 2475754826, %v292
      %v296 = vor.u32 %v294, %v295
      %v297 = vshll.u32 2475754826, %v291
      %v298 = vshrl.u32 2131351028, %v292
      %v299 = vor.u32 %v297, %v298
      %v300 = vshll.u32 2131351028, %v291
      %v301 = vshrl.u32 2102212464, %v292
      %v302 = vor.u32 %v300, %v301
      %v303 = vshll.u32 2102212464, %v291
      %v304 = vshrl.u32 920167782, %v292
      %v305 = vor.u32 %v303, %v304
      %v306 = vshll.u32 920167782, %v291
      %v307 = vshrl.u32 1326507024, %v292
      %v308 = vor.u32 %v306, %v307
      %vm309 = vcmp.lt.s32.totalorder %v290, 1
      %vm310 = vcmp.lt.s32.totalorder %v290, 2
      %vm311 = vcmp.lt.s32.totalorder %v290, 3
      %vm312 = vcmp.lt.s32.totalorder %v290, 4
      %v313 = vsel %vm309, %v293, %v296
      %v314 = vsel %vm312, %v302, 2102212464
      %v315 = vsel %vm311, %v299, %v314
      %v316 = vsel %vm310, %v313, %v315
      %v317 = vsel %vm309, %v296, %v299
      %v318 = vsel %vm312, %v305, 920167782
      %v319 = vsel %vm311, %v302, %v318
      %v320 = vsel %vm310, %v317, %v319
      %v321 = vsel %vm309, %v299, %v302
      %v322 = vsel %vm312, %v308, 1326507024
      %v323 = vsel %vm311, %v305, %v322
      %v324 = vsel %vm310, %v321, %v323
      %v325 = vshll.u32 %v285, 8
      %v326 = vmul.u32.u64.compose %v325, %v324
      %v327 = vextract.low.u32 %v326
      %v328 = vextract.high.u32 %v326
      %v329 = vmul.u32.u64.compose %v325, %v320
      %v330 = vextract.low.u32 %v329
      %v331 = vextract.high.u32 %v329
      %v332 = vmul.u32 %v325, %v316
      %v333 = vadd.s32 %v328, %v330
      %vm334 = vc.u32 %v328, %v330
      %v335 = vadd.s32 %v331, 1
      %v336 = vsel %vm334, %v335, %v331
      %v337 = vadd.s32 %v332, %v336
      %v338 = vadd.s32 %v337, 536870912
      %v339 = vshrl.u32 %v338, 30
      %v340 = vshll.u32 %v339, 30
      %v341 = vsub.s32 %v337, %v340
      %vm342 = vcmp.lt.s32.totalorder %v341, 0
      %v343 = vsub.s32 0, %v341
      %v344 = vsel %vm342, %v343, %v341
      %v345 = vclz %v344
      %v346 = vsub.s32 %v345, 2
      %vm347 = vcmp.gt.s32.totalorder 0, %v346
      %v348 = vsel %vm347, 0, %v346
      %v349 = vsub.s32 32, %v348
      %v350 = vshll.u32 %v341, %v348
      %v351 = vshrl.u32 %v333, %v349
      %v352 = vor.u32 %v350, %v351
      %v353 = vsub.s32 4294967266, %v348
      %v354 = vadd.s32 %v353, 127
      %v355 = vshll.u32 %v354, 23
      %v356 = vor.u32 4788187, %v355
      %v357 = vand.u32 2147483647, %v356
      %v359 = vcvt.s32.f32 %v352
      %v360 = vmul.f32 %v359, %v357
      %v361 = vxor.u32 %v360, 2147483648
      %v362 = vsel %vm279, %v361, %v360
      %v363 = vsub.s32 4, %v339
      %v364 = vsel %vm279, %v363, %v339
      %v365 = vsel %vm278, %v156, %v362
      %v366 = vsel %vm278, 0, %v364
      %v367 = vcosq.f32.pop %v365
      %v368 = vsinq.f32.pop %v365
      %vm369 = vweird.f32 %v156
      %v370 = vadd.s32 %v366, 3
      %v371 = vand.u32 %v370, 3
      %vm372 = vcmp.lt.s32.totalorder %v371, 2
      %vm373 = vcmp.eq.s32.totalorder %v371, 0
      %v374 = vxor.u32 %v368, 2147483648
      %v375 = vsel %vm373, %v367, %v374
      %vm376 = vcmp.eq.s32.totalorder %v371, 2
      %v377 = vxor.u32 %v367, 2147483648
      %v378 = vsel %vm376, %v377, %v368
      %v379 = vsel %vm372, %v375, %v378
      %v380 = vsel %vm369, nan, %v379
      %v381 = vand.u32 2147483647, %v157
      %vm382 = vcmp.le.f32.partialorder %v381, 0.7853982
      %vm383 = vcmp.lt.s32.totalorder %v157, 0
      %v384 = vand.u32 %v157, 2139095040
      %v385 = vshrl.u32 %v384, 23
      %v386 = vsub.s32 %v385, 127
      %v387 = vand.u32 2147483647, %v157
      %v388 = vand.u32 %v387, 8388607
      %v389 = vor.u32 %v388, 8388608
      %v390 = vsub.s32 0, %v389
      %v391 = vadd.s32 %v386, 1
      %vm392 = vcmp.gt.s32.totalorder %v391, 0
      %v393 = vsel %vm392, %v391, 0
      %v394 = vshrl.u32 %v393, 5
      %v395 = vand.u32 %v393, 31
      %v396 = vsub.s32 32, %v395
      %v397 = vshrl.u32 683565275, %v396
      %v398 = vshll.u32 683565275, %v395
      %v399 = vshrl.u32 2475754826, %v396
      %v400 = vor.u32 %v398, %v399
      %v401 = vshll.u32 2475754826, %v395
      %v402 = vshrl.u32 2131351028, %v396
      %v403 = vor.u32 %v401, %v402
      %v404 = vshll.u32 2131351028, %v395
      %v405 = vshrl.u32 2102212464, %v396
      %v406 = vor.u32 %v404, %v405
      %v407 = vshll.u32 2102212464, %v395
      %v408 = vshrl.u32 920167782, %v396
      %v409 = vor.u32 %v407, %v408
      %v410 = vshll.u32 920167782, %v395
      %v411 = vshrl.u32 1326507024, %v396
      %v412 = vor.u32 %v410, %v411
      %vm413 = vcmp.lt.s32.totalorder %v394, 1
      %vm414 = vcmp.lt.s32.totalorder %v394, 2
      %vm415 = vcmp.lt.s32.totalorder %v394, 3
      %vm416 = vcmp.lt.s32.totalorder %v394, 4
      %v417 = vsel %vm413, %v397, %v400
      %v418 = vsel %vm416, %v406, 2102212464
      %v419 = vsel %vm415, %v403, %v418
      %v420 = vsel %vm414, %v417, %v419
      %v421 = vsel %vm413, %v400, %v403
      %v422 = vsel %vm416, %v409, 920167782
      %v423 = vsel %vm415, %v406, %v422
      %v424 = vsel %vm414, %v421, %v423
      %v425 = vsel %vm413, %v403, %v406
      %v426 = vsel %vm416, %v412, 1326507024
      %v427 = vsel %vm415, %v409, %v426
      %v428 = vsel %vm414, %v425, %v427
      %v429 = vshll.u32 %v389, 8
      %v430 = vmul.u32.u64.compose %v429, %v428
      %v431 = vextract.low.u32 %v430
      %v432 = vextract.high.u32 %v430
      %v433 = vmul.u32.u64.compose %v429, %v424
      %v434 = vextract.low.u32 %v433
      %v435 = vextract.high.u32 %v433
      %v436 = vmul.u32 %v429, %v420
      %v437 = vadd.s32 %v432, %v434
      %vm438 = vc.u32 %v432, %v434
      %v439 = vadd.s32 %v435, 1
      %v440 = vsel %vm438, %v439, %v435
      %v441 = vadd.s32 %v436, %v440
      %v442 = vadd.s32 %v441, 536870912
      %v443 = vshrl.u32 %v442, 30
      %v444 = vshll.u32 %v443, 30
      %v445 = vsub.s32 %v441, %v444
      %vm446 = vcmp.lt.s32.totalorder %v445, 0
      %v447 = vsub.s32 0, %v445
      %v448 = vsel %vm446, %v447, %v445
      %v449 = vclz %v448
      %v450 = vsub.s32 %v449, 2
      %vm451 = vcmp.gt.s32.totalorder 0, %v450
      %v452 = vsel %vm451, 0, %v450
      %v453 = vsub.s32 32, %v452
      %v454 = vshll.u32 %v445, %v452
      %v455 = vshrl.u32 %v437, %v453
      %v456 = vor.u32 %v454, %v455
      %v457 = vsub.s32 4294967266, %v452
      %v458 = vadd.s32 %v457, 127
      %v459 = vshll.u32 %v458, 23
      %v460 = vor.u32 4788187, %v459
      %v461 = vand.u32 2147483647, %v460
      %v463 = vcvt.s32.f32 %v456
      %v464 = vmul.f32 %v463, %v461
      %v465 = vxor.u32 %v464, 2147483648
      %v466 = vsel %vm383, %v465, %v464
      %v467 = vsub.s32 4, %v443
      %v468 = vsel %vm383, %v467, %v443
      %v469 = vsel %vm382, %v157, %v466
      %v470 = vsel %vm382, 0, %v468
      %v471 = vcosq.f32.pop %v469
      %v472 = vsinq.f32.pop %v469
      %vm473 = vweird.f32 %v157
      %v474 = vadd.s32 %v470, 3
      %v475 = vand.u32 %v474, 3
      %vm476 = vcmp.lt.s32.totalorder %v475, 2
      %vm477 = vcmp.eq.s32.totalorder %v475, 0
      %v478 = vxor.u32 %v472, 2147483648
      %v479 = vsel %vm477, %v471, %v478
      %vm480 = vcmp.eq.s32.totalorder %v475, 2
      %v481 = vxor.u32 %v471, 2147483648
      %v482 = vsel %vm480, %v481, %v472
      %v483 = vsel %vm476, %v479, %v482
      %v484 = vsel %vm473, nan, %v483
      %v485 = vand.u32 2147483647, %v158
      %vm486 = vcmp.le.f32.partialorder %v485, 0.7853982
      %vm487 = vcmp.lt.s32.totalorder %v158, 0
      %v488 = vand.u32 %v158, 2139095040
      %v489 = vshrl.u32 %v488, 23
      %v490 = vsub.s32 %v489, 127
      %v491 = vand.u32 2147483647, %v158
      %v492 = vand.u32 %v491, 8388607
      %v493 = vor.u32 %v492, 8388608
      %v494 = vsub.s32 0, %v493
      %v495 = vadd.s32 %v490, 1
      %vm496 = vcmp.gt.s32.totalorder %v495, 0
      %v497 = vsel %vm496, %v495, 0
      %v498 = vshrl.u32 %v497, 5
      %v499 = vand.u32 %v497, 31
      %v500 = vsub.s32 32, %v499
      %v501 = vshrl.u32 683565275, %v500
      %v502 = vshll.u32 683565275, %v499
      %v503 = vshrl.u32 2475754826, %v500
      %v504 = vor.u32 %v502, %v503
      %v505 = vshll.u32 2475754826, %v499
      %v506 = vshrl.u32 2131351028, %v500
      %v507 = vor.u32 %v505, %v506
      %v508 = vshll.u32 2131351028, %v499
      %v509 = vshrl.u32 2102212464, %v500
      %v510 = vor.u32 %v508, %v509
      %v511 = vshll.u32 2102212464, %v499
      %v512 = vshrl.u32 920167782, %v500
      %v513 = vor.u32 %v511, %v512
      %v514 = vshll.u32 920167782, %v499
      %v515 = vshrl.u32 1326507024, %v500
      %v516 = vor.u32 %v514, %v515
      %vm517 = vcmp.lt.s32.totalorder %v498, 1
      %vm518 = vcmp.lt.s32.totalorder %v498, 2
      %vm519 = vcmp.lt.s32.totalorder %v498, 3
      %vm520 = vcmp.lt.s32.totalorder %v498, 4
      %v521 = vsel %vm517, %v501, %v504
      %v522 = vsel %vm520, %v510, 2102212464
      %v523 = vsel %vm519, %v507, %v522
      %v524 = vsel %vm518, %v521, %v523
      %v525 = vsel %vm517, %v504, %v507
      %v526 = vsel %vm520, %v513, 920167782
      %v527 = vsel %vm519, %v510, %v526
      %v528 = vsel %vm518, %v525, %v527
      %v529 = vsel %vm517, %v507, %v510
      %v530 = vsel %vm520, %v516, 1326507024
      %v531 = vsel %vm519, %v513, %v530
      %v532 = vsel %vm518, %v529, %v531
      %v533 = vshll.u32 %v493, 8
      %v534 = vmul.u32.u64.compose %v533, %v532
      %v535 = vextract.low.u32 %v534
      %v536 = vextract.high.u32 %v534
      %v537 = vmul.u32.u64.compose %v533, %v528
      %v538 = vextract.low.u32 %v537
      %v539 = vextract.high.u32 %v537
      %v540 = vmul.u32 %v533, %v524
      %v541 = vadd.s32 %v536, %v538
      %vm542 = vc.u32 %v536, %v538
      %v543 = vadd.s32 %v539, 1
      %v544 = vsel %vm542, %v543, %v539
      %v545 = vadd.s32 %v540, %v544
      %v546 = vadd.s32 %v545, 536870912
      %v547 = vshrl.u32 %v546, 30
      %v548 = vshll.u32 %v547, 30
      %v549 = vsub.s32 %v545, %v548
      %vm550 = vcmp.lt.s32.totalorder %v549, 0
      %v551 = vsub.s32 0, %v549
      %v552 = vsel %vm550, %v551, %v549
      %v553 = vclz %v552
      %v554 = vsub.s32 %v553, 2
      %vm555 = vcmp.gt.s32.totalorder 0, %v554
      %v556 = vsel %vm555, 0, %v554
      %v557 = vsub.s32 32, %v556
      %v558 = vshll.u32 %v549, %v556
      %v559 = vshrl.u32 %v541, %v557
      %v560 = vor.u32 %v558, %v559
      %v561 = vsub.s32 4294967266, %v556
      %v562 = vadd.s32 %v561, 127
      %v563 = vshll.u32 %v562, 23
      %v564 = vor.u32 4788187, %v563
      %v565 = vand.u32 2147483647, %v564
      %v567 = vcvt.s32.f32 %v560
      %v568 = vmul.f32 %v567, %v565
      %v569 = vxor.u32 %v568, 2147483648
      %v570 = vsel %vm487, %v569, %v568
      %v571 = vsub.s32 4, %v547
      %v572 = vsel %vm487, %v571, %v547
      %v573 = vsel %vm486, %v158, %v570
      %v574 = vsel %vm486, 0, %v572
      %v575 = vcosq.f32.pop %v573
      %v576 = vsinq.f32.pop %v573
      %vm577 = vweird.f32 %v158
      %v578 = vadd.s32 %v574, 3
      %v579 = vand.u32 %v578, 3
      %vm580 = vcmp.lt.s32.totalorder %v579, 2
      %vm581 = vcmp.eq.s32.totalorder %v579, 0
      %v582 = vxor.u32 %v576, 2147483648
      %v583 = vsel %vm581, %v575, %v582
      %vm584 = vcmp.eq.s32.totalorder %v579, 2
      %v585 = vxor.u32 %v575, 2147483648
      %v586 = vsel %vm584, %v585, %v576
      %v587 = vsel %vm580, %v583, %v586
      %v588 = vsel %vm577, nan, %v587
      %v589 = vand.u32 2147483647, %v159
      %vm590 = vcmp.le.f32.partialorder %v589, 0.7853982
      %vm591 = vcmp.lt.s32.totalorder %v159, 0
      %v592 = vand.u32 %v159, 2139095040
      %v593 = vshrl.u32 %v592, 23
      %v594 = vsub.s32 %v593, 127
      %v595 = vand.u32 2147483647, %v159
      %v596 = vand.u32 %v595, 8388607
      %v597 = vor.u32 %v596, 8388608
      %v598 = vsub.s32 0, %v597
      %v599 = vadd.s32 %v594, 1
      %vm600 = vcmp.gt.s32.totalorder %v599, 0
      %v601 = vsel %vm600, %v599, 0
      %v602 = vshrl.u32 %v601, 5
      %v603 = vand.u32 %v601, 31
      %v604 = vsub.s32 32, %v603
      %v605 = vshrl.u32 683565275, %v604
      %v606 = vshll.u32 683565275, %v603
      %v607 = vshrl.u32 2475754826, %v604
      %v608 = vor.u32 %v606, %v607
      %v609 = vshll.u32 2475754826, %v603
      %v610 = vshrl.u32 2131351028, %v604
      %v611 = vor.u32 %v609, %v610
      %v612 = vshll.u32 2131351028, %v603
      %v613 = vshrl.u32 2102212464, %v604
      %v614 = vor.u32 %v612, %v613
      %v615 = vshll.u32 2102212464, %v603
      %v616 = vshrl.u32 920167782, %v604
      %v617 = vor.u32 %v615, %v616
      %v618 = vshll.u32 920167782, %v603
      %v619 = vshrl.u32 1326507024, %v604
      %v620 = vor.u32 %v618, %v619
      %vm621 = vcmp.lt.s32.totalorder %v602, 1
      %vm622 = vcmp.lt.s32.totalorder %v602, 2
      %vm623 = vcmp.lt.s32.totalorder %v602, 3
      %vm624 = vcmp.lt.s32.totalorder %v602, 4
      %v625 = vsel %vm621, %v605, %v608
      %v626 = vsel %vm624, %v614, 2102212464
      %v627 = vsel %vm623, %v611, %v626
      %v628 = vsel %vm622, %v625, %v627
      %v629 = vsel %vm621, %v608, %v611
      %v630 = vsel %vm624, %v617, 920167782
      %v631 = vsel %vm623, %v614, %v630
      %v632 = vsel %vm622, %v629, %v631
      %v633 = vsel %vm621, %v611, %v614
      %v634 = vsel %vm624, %v620, 1326507024
      %v635 = vsel %vm623, %v617, %v634
      %v636 = vsel %vm622, %v633, %v635
      %v637 = vshll.u32 %v597, 8
      %v638 = vmul.u32.u64.compose %v637, %v636
      %v639 = vextract.low.u32 %v638
      %v640 = vextract.high.u32 %v638
      %v641 = vmul.u32.u64.compose %v637, %v632
      %v642 = vextract.low.u32 %v641
      %v643 = vextract.high.u32 %v641
      %v644 = vmul.u32 %v637, %v628
      %v645 = vadd.s32 %v640, %v642
      %vm646 = vc.u32 %v640, %v642
      %v647 = vadd.s32 %v643, 1
      %v648 = vsel %vm646, %v647, %v643
      %v649 = vadd.s32 %v644, %v648
      %v650 = vadd.s32 %v649, 536870912
      %v651 = vshrl.u32 %v650, 30
      %v652 = vshll.u32 %v651, 30
      %v653 = vsub.s32 %v649, %v652
      %vm654 = vcmp.lt.s32.totalorder %v653, 0
      %v655 = vsub.s32 0, %v653
      %v656 = vsel %vm654, %v655, %v653
      %v657 = vclz %v656
      %v658 = vsub.s32 %v657, 2
      %vm659 = vcmp.gt.s32.totalorder 0, %v658
      %v660 = vsel %vm659, 0, %v658
      %v661 = vsub.s32 32, %v660
      %v662 = vshll.u32 %v653, %v660
      %v663 = vshrl.u32 %v645, %v661
      %v664 = vor.u32 %v662, %v663
      %v665 = vsub.s32 4294967266, %v660
      %v666 = vadd.s32 %v665, 127
      %v667 = vshll.u32 %v666, 23
      %v668 = vor.u32 4788187, %v667
      %v669 = vand.u32 2147483647, %v668
      %v671 = vcvt.s32.f32 %v664
      %v672 = vmul.f32 %v671, %v669
      %v673 = vxor.u32 %v672, 2147483648
      %v674 = vsel %vm591, %v673, %v672
      %v675 = vsub.s32 4, %v651
      %v676 = vsel %vm591, %v675, %v651
      %v677 = vsel %vm590, %v159, %v674
      %v678 = vsel %vm590, 0, %v676
      %v679 = vcosq.f32.pop %v677
      %v680 = vsinq.f32.pop %v677
      %vm681 = vweird.f32 %v159
      %v682 = vadd.s32 %v678, 3
      %v683 = vand.u32 %v682, 3
      %vm684 = vcmp.lt.s32.totalorder %v683, 2
      %vm685 = vcmp.eq.s32.totalorder %v683, 0
      %v686 = vxor.u32 %v680, 2147483648
      %v687 = vsel %vm685, %v679, %v686
      %vm688 = vcmp.eq.s32.totalorder %v683, 2
      %v689 = vxor.u32 %v679, 2147483648
      %v690 = vsel %vm688, %v689, %v680
      %v691 = vsel %vm684, %v687, %v690
      %v692 = vsel %vm681, nan, %v691
      %v693 = vand.u32 2147483647, %v160
      %vm694 = vcmp.le.f32.partialorder %v693, 0.7853982
      %vm695 = vcmp.lt.s32.totalorder %v160, 0
      %v696 = vand.u32 %v160, 2139095040
      %v697 = vshrl.u32 %v696, 23
      %v698 = vsub.s32 %v697, 127
      %v699 = vand.u32 2147483647, %v160
      %v700 = vand.u32 %v699, 8388607
      %v701 = vor.u32 %v700, 8388608
      %v702 = vsub.s32 0, %v701
      %v703 = vadd.s32 %v698, 1
      %vm704 = vcmp.gt.s32.totalorder %v703, 0
      %v705 = vsel %vm704, %v703, 0
      %v706 = vshrl.u32 %v705, 5
      %v707 = vand.u32 %v705, 31
      %v708 = vsub.s32 32, %v707
      %v709 = vshrl.u32 683565275, %v708
      %v710 = vshll.u32 683565275, %v707
      %v711 = vshrl.u32 2475754826, %v708
      %v712 = vor.u32 %v710, %v711
      %v713 = vshll.u32 2475754826, %v707
      %v714 = vshrl.u32 2131351028, %v708
      %v715 = vor.u32 %v713, %v714
      %v716 = vshll.u32 2131351028, %v707
      %v717 = vshrl.u32 2102212464, %v708
      %v718 = vor.u32 %v716, %v717
      %v719 = vshll.u32 2102212464, %v707
      %v720 = vshrl.u32 920167782, %v708
      %v721 = vor.u32 %v719, %v720
      %v722 = vshll.u32 920167782, %v707
      %v723 = vshrl.u32 1326507024, %v708
      %v724 = vor.u32 %v722, %v723
      %vm725 = vcmp.lt.s32.totalorder %v706, 1
      %vm726 = vcmp.lt.s32.totalorder %v706, 2
      %vm727 = vcmp.lt.s32.totalorder %v706, 3
      %vm728 = vcmp.lt.s32.totalorder %v706, 4
      %v729 = vsel %vm725, %v709, %v712
      %v730 = vsel %vm728, %v718, 2102212464
      %v731 = vsel %vm727, %v715, %v730
      %v732 = vsel %vm726, %v729, %v731
      %v733 = vsel %vm725, %v712, %v715
      %v734 = vsel %vm728, %v721, 920167782
      %v735 = vsel %vm727, %v718, %v734
      %v736 = vsel %vm726, %v733, %v735
      %v737 = vsel %vm725, %v715, %v718
      %v738 = vsel %vm728, %v724, 1326507024
      %v739 = vsel %vm727, %v721, %v738
      %v740 = vsel %vm726, %v737, %v739
      %v741 = vshll.u32 %v701, 8
      %v742 = vmul.u32.u64.compose %v741, %v740
      %v743 = vextract.low.u32 %v742
      %v744 = vextract.high.u32 %v742
      %v745 = vmul.u32.u64.compose %v741, %v736
      %v746 = vextract.low.u32 %v745
      %v747 = vextract.high.u32 %v745
      %v748 = vmul.u32 %v741, %v732
      %v749 = vadd.s32 %v744, %v746
      %vm750 = vc.u32 %v744, %v746
      %v751 = vadd.s32 %v747, 1
      %v752 = vsel %vm750, %v751, %v747
      %v753 = vadd.s32 %v748, %v752
      %v754 = vadd.s32 %v753, 536870912
      %v755 = vshrl.u32 %v754, 30
      %v756 = vshll.u32 %v755, 30
      %v757 = vsub.s32 %v753, %v756
      %vm758 = vcmp.lt.s32.totalorder %v757, 0
      %v759 = vsub.s32 0, %v757
      %v760 = vsel %vm758, %v759, %v757
      %v761 = vclz %v760
      %v762 = vsub.s32 %v761, 2
      %vm763 = vcmp.gt.s32.totalorder 0, %v762
      %v764 = vsel %vm763, 0, %v762
      %v765 = vsub.s32 32, %v764
      %v766 = vshll.u32 %v757, %v764
      %v767 = vshrl.u32 %v749, %v765
      %v768 = vor.u32 %v766, %v767
      %v769 = vsub.s32 4294967266, %v764
      %v770 = vadd.s32 %v769, 127
      %v771 = vshll.u32 %v770, 23
      %v772 = vor.u32 4788187, %v771
      %v773 = vand.u32 2147483647, %v772
      %v775 = vcvt.s32.f32 %v768
      %v776 = vmul.f32 %v775, %v773
      %v777 = vxor.u32 %v776, 2147483648
      %v778 = vsel %vm695, %v777, %v776
      %v779 = vsub.s32 4, %v755
      %v780 = vsel %vm695, %v779, %v755
      %v781 = vsel %vm694, %v160, %v778
      %v782 = vsel %vm694, 0, %v780
      %v783 = vcosq.f32.pop %v781
      %v784 = vsinq.f32.pop %v781
      %vm785 = vweird.f32 %v160
      %v786 = vadd.s32 %v782, 3
      %v787 = vand.u32 %v786, 3
      %vm788 = vcmp.lt.s32.totalorder %v787, 2
      %vm789 = vcmp.eq.s32.totalorder %v787, 0
      %v790 = vxor.u32 %v784, 2147483648
      %v791 = vsel %vm789, %v783, %v790
      %vm792 = vcmp.eq.s32.totalorder %v787, 2
      %v793 = vxor.u32 %v783, 2147483648
      %v794 = vsel %vm792, %v793, %v784
      %v795 = vsel %vm788, %v791, %v794
      %v796 = vsel %vm785, nan, %v795
      %v797 = vand.u32 2147483647, %v155
      %vm798 = vcmp.le.f32.partialorder %v797, 0.7853982
      %vm799 = vcmp.lt.s32.totalorder %v155, 0
      %v800 = vand.u32 %v155, 2139095040
      %v801 = vshrl.u32 %v800, 23
      %v802 = vsub.s32 %v801, 127
      %v803 = vand.u32 2147483647, %v155
      %v804 = vand.u32 %v803, 8388607
      %v805 = vor.u32 %v804, 8388608
      %v806 = vsub.s32 0, %v805
      %v807 = vadd.s32 %v802, 1
      %vm808 = vcmp.gt.s32.totalorder %v807, 0
      %v809 = vsel %vm808, %v807, 0
      %v810 = vshrl.u32 %v809, 5
      %v811 = vand.u32 %v809, 31
      %v812 = vsub.s32 32, %v811
      %v813 = vshrl.u32 683565275, %v812
      %v814 = vshll.u32 683565275, %v811
      %v815 = vshrl.u32 2475754826, %v812
      %v816 = vor.u32 %v814, %v815
      %v817 = vshll.u32 2475754826, %v811
      %v818 = vshrl.u32 2131351028, %v812
      %v819 = vor.u32 %v817, %v818
      %v820 = vshll.u32 2131351028, %v811
      %v821 = vshrl.u32 2102212464, %v812
      %v822 = vor.u32 %v820, %v821
      %v823 = vshll.u32 2102212464, %v811
      %v824 = vshrl.u32 920167782, %v812
      %v825 = vor.u32 %v823, %v824
      %v826 = vshll.u32 920167782, %v811
      %v827 = vshrl.u32 1326507024, %v812
      %v828 = vor.u32 %v826, %v827
      %vm829 = vcmp.lt.s32.totalorder %v810, 1
      %vm830 = vcmp.lt.s32.totalorder %v810, 2
      %vm831 = vcmp.lt.s32.totalorder %v810, 3
      %vm832 = vcmp.lt.s32.totalorder %v810, 4
      %v833 = vsel %vm829, %v813, %v816
      %v834 = vsel %vm832, %v822, 2102212464
      %v835 = vsel %vm831, %v819, %v834
      %v836 = vsel %vm830, %v833, %v835
      %v837 = vsel %vm829, %v816, %v819
      %v838 = vsel %vm832, %v825, 920167782
      %v839 = vsel %vm831, %v822, %v838
      %v840 = vsel %vm830, %v837, %v839
      %v841 = vsel %vm829, %v819, %v822
      %v842 = vsel %vm832, %v828, 1326507024
      %v843 = vsel %vm831, %v825, %v842
      %v844 = vsel %vm830, %v841, %v843
      %v845 = vshll.u32 %v805, 8
      %v846 = vmul.u32.u64.compose %v845, %v844
      %v847 = vextract.low.u32 %v846
      %v848 = vextract.high.u32 %v846
      %v849 = vmul.u32.u64.compose %v845, %v840
      %v850 = vextract.low.u32 %v849
      %v851 = vextract.high.u32 %v849
      %v852 = vmul.u32 %v845, %v836
      %v853 = vadd.s32 %v848, %v850
      %vm854 = vc.u32 %v848, %v850
      %v855 = vadd.s32 %v851, 1
      %v856 = vsel %vm854, %v855, %v851
      %v857 = vadd.s32 %v852, %v856
      %v858 = vadd.s32 %v857, 536870912
      %v859 = vshrl.u32 %v858, 30
      %v860 = vshll.u32 %v859, 30
      %v861 = vsub.s32 %v857, %v860
      %vm862 = vcmp.lt.s32.totalorder %v861, 0
      %v863 = vsub.s32 0, %v861
      %v864 = vsel %vm862, %v863, %v861
      %v865 = vclz %v864
      %v866 = vsub.s32 %v865, 2
      %vm867 = vcmp.gt.s32.totalorder 0, %v866
      %v868 = vsel %vm867, 0, %v866
      %v869 = vsub.s32 32, %v868
      %v870 = vshll.u32 %v861, %v868
      %v871 = vshrl.u32 %v853, %v869
      %v872 = vor.u32 %v870, %v871
      %v873 = vsub.s32 4294967266, %v868
      %v874 = vadd.s32 %v873, 127
      %v875 = vshll.u32 %v874, 23
      %v876 = vor.u32 4788187, %v875
      %v877 = vand.u32 2147483647, %v876
      %v879 = vcvt.s32.f32 %v872
      %v880 = vmul.f32 %v879, %v877
      %v881 = vxor.u32 %v880, 2147483648
      %v882 = vsel %vm799, %v881, %v880
      %v883 = vsub.s32 4, %v859
      %v884 = vsel %vm799, %v883, %v859
      %v885 = vsel %vm798, %v155, %v882
      %v886 = vsel %vm798, 0, %v884
      %v887 = vcosq.f32.pop %v885
      %v888 = vsinq.f32.pop %v885
      %vm889 = vweird.f32 %v155
      %v890 = vand.u32 %v886, 3
      %vm891 = vcmp.lt.s32.totalorder %v890, 2
      %vm892 = vcmp.eq.s32.totalorder %v890, 0
      %v893 = vxor.u32 %v888, 2147483648
      %v894 = vsel %vm892, %v887, %v893
      %vm895 = vcmp.eq.s32.totalorder %v890, 2
      %v896 = vxor.u32 %v887, 2147483648
      %v897 = vsel %vm895, %v896, %v888
      %v898 = vsel %vm891, %v894, %v897
      %v899 = vsel %vm889, nan, %v898
      %v900 = vand.u32 2147483647, %v156
      %vm901 = vcmp.le.f32.partialorder %v900, 0.7853982
      %vm902 = vcmp.lt.s32.totalorder %v156, 0
      %v903 = vand.u32 %v156, 2139095040
      %v904 = vshrl.u32 %v903, 23
      %v905 = vsub.s32 %v904, 127
      %v906 = vand.u32 2147483647, %v156
      %v907 = vand.u32 %v906, 8388607
      %v908 = vor.u32 %v907, 8388608
      %v909 = vsub.s32 0, %v908
      %v910 = vadd.s32 %v905, 1
      %vm911 = vcmp.gt.s32.totalorder %v910, 0
      %v912 = vsel %vm911, %v910, 0
      %v913 = vshrl.u32 %v912, 5
      %v914 = vand.u32 %v912, 31
      %v915 = vsub.s32 32, %v914
      %v916 = vshrl.u32 683565275, %v915
      %v917 = vshll.u32 683565275, %v914
      %v918 = vshrl.u32 2475754826, %v915
      %v919 = vor.u32 %v917, %v918
      %v920 = vshll.u32 2475754826, %v914
      %v921 = vshrl.u32 2131351028, %v915
      %v922 = vor.u32 %v920, %v921
      %v923 = vshll.u32 2131351028, %v914
      %v924 = vshrl.u32 2102212464, %v915
      %v925 = vor.u32 %v923, %v924
      %v926 = vshll.u32 2102212464, %v914
      %v927 = vshrl.u32 920167782, %v915
      %v928 = vor.u32 %v926, %v927
      %v929 = vshll.u32 920167782, %v914
      %v930 = vshrl.u32 1326507024, %v915
      %v931 = vor.u32 %v929, %v930
      %vm932 = vcmp.lt.s32.totalorder %v913, 1
      %vm933 = vcmp.lt.s32.totalorder %v913, 2
      %vm934 = vcmp.lt.s32.totalorder %v913, 3
      %vm935 = vcmp.lt.s32.totalorder %v913, 4
      %v936 = vsel %vm932, %v916, %v919
      %v937 = vsel %vm935, %v925, 2102212464
      %v938 = vsel %vm934, %v922, %v937
      %v939 = vsel %vm933, %v936, %v938
      %v940 = vsel %vm932, %v919, %v922
      %v941 = vsel %vm935, %v928, 920167782
      %v942 = vsel %vm934, %v925, %v941
      %v943 = vsel %vm933, %v940, %v942
      %v944 = vsel %vm932, %v922, %v925
      %v945 = vsel %vm935, %v931, 1326507024
      %v946 = vsel %vm934, %v928, %v945
      %v947 = vsel %vm933, %v944, %v946
      %v948 = vshll.u32 %v908, 8
      %v949 = vmul.u32.u64.compose %v948, %v947
      %v950 = vextract.low.u32 %v949
      %v951 = vextract.high.u32 %v949
      %v952 = vmul.u32.u64.compose %v948, %v943
      %v953 = vextract.low.u32 %v952
      %v954 = vextract.high.u32 %v952
      %v955 = vmul.u32 %v948, %v939
      %v956 = vadd.s32 %v951, %v953
      %vm957 = vc.u32 %v951, %v953
      %v958 = vadd.s32 %v954, 1
      %v959 = vsel %vm957, %v958, %v954
      %v960 = vadd.s32 %v955, %v959
      %v961 = vadd.s32 %v960, 536870912
      %v962 = vshrl.u32 %v961, 30
      %v963 = vshll.u32 %v962, 30
      %v964 = vsub.s32 %v960, %v963
      %vm965 = vcmp.lt.s32.totalorder %v964, 0
      %v966 = vsub.s32 0, %v964
      %v967 = vsel %vm965, %v966, %v964
      %v968 = vclz %v967
      %v969 = vsub.s32 %v968, 2
      %vm970 = vcmp.gt.s32.totalorder 0, %v969
      %v971 = vsel %vm970, 0, %v969
      %v972 = vsub.s32 32, %v971
      %v973 = vshll.u32 %v964, %v971
      %v974 = vshrl.u32 %v956, %v972
      %v975 = vor.u32 %v973, %v974
      %v976 = vsub.s32 4294967266, %v971
      %v977 = vadd.s32 %v976, 127
      %v978 = vshll.u32 %v977, 23
      %v979 = vor.u32 4788187, %v978
      %v980 = vand.u32 2147483647, %v979
      %v982 = vcvt.s32.f32 %v975
      %v983 = vmul.f32 %v982, %v980
      %v984 = vxor.u32 %v983, 2147483648
      %v985 = vsel %vm902, %v984, %v983
      %v986 = vsub.s32 4, %v962
      %v987 = vsel %vm902, %v986, %v962
      %v988 = vsel %vm901, %v156, %v985
      %v989 = vsel %vm901, 0, %v987
      %v990 = vcosq.f32.pop %v988
      %v991 = vsinq.f32.pop %v988
      %vm992 = vweird.f32 %v156
      %v993 = vand.u32 %v989, 3
      %vm994 = vcmp.lt.s32.totalorder %v993, 2
      %vm995 = vcmp.eq.s32.totalorder %v993, 0
      %v996 = vxor.u32 %v991, 2147483648
      %v997 = vsel %vm995, %v990, %v996
      %vm998 = vcmp.eq.s32.totalorder %v993, 2
      %v999 = vxor.u32 %v990, 2147483648
      %v1000 = vsel %vm998, %v999, %v991
      %v1001 = vsel %vm994, %v997, %v1000
      %v1002 = vsel %vm992, nan, %v1001
      %v1003 = vand.u32 2147483647, %v157
      %vm1004 = vcmp.le.f32.partialorder %v1003, 0.7853982
      %vm1005 = vcmp.lt.s32.totalorder %v157, 0
      %v1006 = vand.u32 %v157, 2139095040
      %v1007 = vshrl.u32 %v1006, 23
      %v1008 = vsub.s32 %v1007, 127
      %v1009 = vand.u32 2147483647, %v157
      %v1010 = vand.u32 %v1009, 8388607
      %v1011 = vor.u32 %v1010, 8388608
      %v1012 = vsub.s32 0, %v1011
      %v1013 = vadd.s32 %v1008, 1
      %vm1014 = vcmp.gt.s32.totalorder %v1013, 0
      %v1015 = vsel %vm1014, %v1013, 0
      %v1016 = vshrl.u32 %v1015, 5
      %v1017 = vand.u32 %v1015, 31
      %v1018 = vsub.s32 32, %v1017
      %v1019 = vshrl.u32 683565275, %v1018
      %v1020 = vshll.u32 683565275, %v1017
      %v1021 = vshrl.u32 2475754826, %v1018
      %v1022 = vor.u32 %v1020, %v1021
      %v1023 = vshll.u32 2475754826, %v1017
      %v1024 = vshrl.u32 2131351028, %v1018
      %v1025 = vor.u32 %v1023, %v1024
      %v1026 = vshll.u32 2131351028, %v1017
      %v1027 = vshrl.u32 2102212464, %v1018
      %v1028 = vor.u32 %v1026, %v1027
      %v1029 = vshll.u32 2102212464, %v1017
      %v1030 = vshrl.u32 920167782, %v1018
      %v1031 = vor.u32 %v1029, %v1030
      %v1032 = vshll.u32 920167782, %v1017
      %v1033 = vshrl.u32 1326507024, %v1018
      %v1034 = vor.u32 %v1032, %v1033
      %vm1035 = vcmp.lt.s32.totalorder %v1016, 1
      %vm1036 = vcmp.lt.s32.totalorder %v1016, 2
      %vm1037 = vcmp.lt.s32.totalorder %v1016, 3
      %vm1038 = vcmp.lt.s32.totalorder %v1016, 4
      %v1039 = vsel %vm1035, %v1019, %v1022
      %v1040 = vsel %vm1038, %v1028, 2102212464
      %v1041 = vsel %vm1037, %v1025, %v1040
      %v1042 = vsel %vm1036, %v1039, %v1041
      %v1043 = vsel %vm1035, %v1022, %v1025
      %v1044 = vsel %vm1038, %v1031, 920167782
      %v1045 = vsel %vm1037, %v1028, %v1044
      %v1046 = vsel %vm1036, %v1043, %v1045
      %v1047 = vsel %vm1035, %v1025, %v1028
      %v1048 = vsel %vm1038, %v1034, 1326507024
      %v1049 = vsel %vm1037, %v1031, %v1048
      %v1050 = vsel %vm1036, %v1047, %v1049
      %v1051 = vshll.u32 %v1011, 8
      %v1052 = vmul.u32.u64.compose %v1051, %v1050
      %v1053 = vextract.low.u32 %v1052
      %v1054 = vextract.high.u32 %v1052
      %v1055 = vmul.u32.u64.compose %v1051, %v1046
      %v1056 = vextract.low.u32 %v1055
      %v1057 = vextract.high.u32 %v1055
      %v1058 = vmul.u32 %v1051, %v1042
      %v1059 = vadd.s32 %v1054, %v1056
      %vm1060 = vc.u32 %v1054, %v1056
      %v1061 = vadd.s32 %v1057, 1
      %v1062 = vsel %vm1060, %v1061, %v1057
      %v1063 = vadd.s32 %v1058, %v1062
      %v1064 = vadd.s32 %v1063, 536870912
      %v1065 = vshrl.u32 %v1064, 30
      %v1066 = vshll.u32 %v1065, 30
      %v1067 = vsub.s32 %v1063, %v1066
      %vm1068 = vcmp.lt.s32.totalorder %v1067, 0
      %v1069 = vsub.s32 0, %v1067
      %v1070 = vsel %vm1068, %v1069, %v1067
      %v1071 = vclz %v1070
      %v1072 = vsub.s32 %v1071, 2
      %vm1073 = vcmp.gt.s32.totalorder 0, %v1072
      %v1074 = vsel %vm1073, 0, %v1072
      %v1075 = vsub.s32 32, %v1074
      %v1076 = vshll.u32 %v1067, %v1074
      %v1077 = vshrl.u32 %v1059, %v1075
      %v1078 = vor.u32 %v1076, %v1077
      %v1079 = vsub.s32 4294967266, %v1074
      %v1080 = vadd.s32 %v1079, 127
      %v1081 = vshll.u32 %v1080, 23
      %v1082 = vor.u32 4788187, %v1081
      %v1083 = vand.u32 2147483647, %v1082
      %v1085 = vcvt.s32.f32 %v1078
      %v1086 = vmul.f32 %v1085, %v1083
      %v1087 = vxor.u32 %v1086, 2147483648
      %v1088 = vsel %vm1005, %v1087, %v1086
      %v1089 = vsub.s32 4, %v1065
      %v1090 = vsel %vm1005, %v1089, %v1065
      %v1091 = vsel %vm1004, %v157, %v1088
      %v1092 = vsel %vm1004, 0, %v1090
      %v1093 = vcosq.f32.pop %v1091
      %v1094 = vsinq.f32.pop %v1091
      %vm1095 = vweird.f32 %v157
      %v1096 = vand.u32 %v1092, 3
      %vm1097 = vcmp.lt.s32.totalorder %v1096, 2
      %vm1098 = vcmp.eq.s32.totalorder %v1096, 0
      %v1099 = vxor.u32 %v1094, 2147483648
      %v1100 = vsel %vm1098, %v1093, %v1099
      %vm1101 = vcmp.eq.s32.totalorder %v1096, 2
      %v1102 = vxor.u32 %v1093, 2147483648
      %v1103 = vsel %vm1101, %v1102, %v1094
      %v1104 = vsel %vm1097, %v1100, %v1103
      %v1105 = vsel %vm1095, nan, %v1104
      %v1106 = vand.u32 2147483647, %v158
      %vm1107 = vcmp.le.f32.partialorder %v1106, 0.7853982
      %vm1108 = vcmp.lt.s32.totalorder %v158, 0
      %v1109 = vand.u32 %v158, 2139095040
      %v1110 = vshrl.u32 %v1109, 23
      %v1111 = vsub.s32 %v1110, 127
      %v1112 = vand.u32 2147483647, %v158
      %v1113 = vand.u32 %v1112, 8388607
      %v1114 = vor.u32 %v1113, 8388608
      %v1115 = vsub.s32 0, %v1114
      %v1116 = vadd.s32 %v1111, 1
      %vm1117 = vcmp.gt.s32.totalorder %v1116, 0
      %v1118 = vsel %vm1117, %v1116, 0
      %v1119 = vshrl.u32 %v1118, 5
      %v1120 = vand.u32 %v1118, 31
      %v1121 = vsub.s32 32, %v1120
      %v1122 = vshrl.u32 683565275, %v1121
      %v1123 = vshll.u32 683565275, %v1120
      %v1124 = vshrl.u32 2475754826, %v1121
      %v1125 = vor.u32 %v1123, %v1124
      %v1126 = vshll.u32 2475754826, %v1120
      %v1127 = vshrl.u32 2131351028, %v1121
      %v1128 = vor.u32 %v1126, %v1127
      %v1129 = vshll.u32 2131351028, %v1120
      %v1130 = vshrl.u32 2102212464, %v1121
      %v1131 = vor.u32 %v1129, %v1130
      %v1132 = vshll.u32 2102212464, %v1120
      %v1133 = vshrl.u32 920167782, %v1121
      %v1134 = vor.u32 %v1132, %v1133
      %v1135 = vshll.u32 920167782, %v1120
      %v1136 = vshrl.u32 1326507024, %v1121
      %v1137 = vor.u32 %v1135, %v1136
      %vm1138 = vcmp.lt.s32.totalorder %v1119, 1
      %vm1139 = vcmp.lt.s32.totalorder %v1119, 2
      %vm1140 = vcmp.lt.s32.totalorder %v1119, 3
      %vm1141 = vcmp.lt.s32.totalorder %v1119, 4
      %v1142 = vsel %vm1138, %v1122, %v1125
      %v1143 = vsel %vm1141, %v1131, 2102212464
      %v1144 = vsel %vm1140, %v1128, %v1143
      %v1145 = vsel %vm1139, %v1142, %v1144
      %v1146 = vsel %vm1138, %v1125, %v1128
      %v1147 = vsel %vm1141, %v1134, 920167782
      %v1148 = vsel %vm1140, %v1131, %v1147
      %v1149 = vsel %vm1139, %v1146, %v1148
      %v1150 = vsel %vm1138, %v1128, %v1131
      %v1151 = vsel %vm1141, %v1137, 1326507024
      %v1152 = vsel %vm1140, %v1134, %v1151
      %v1153 = vsel %vm1139, %v1150, %v1152
      %v1154 = vshll.u32 %v1114, 8
      %v1155 = vmul.u32.u64.compose %v1154, %v1153
      %v1156 = vextract.low.u32 %v1155
      %v1157 = vextract.high.u32 %v1155
      %v1158 = vmul.u32.u64.compose %v1154, %v1149
      %v1159 = vextract.low.u32 %v1158
      %v1160 = vextract.high.u32 %v1158
      %v1161 = vmul.u32 %v1154, %v1145
      %v1162 = vadd.s32 %v1157, %v1159
      %vm1163 = vc.u32 %v1157, %v1159
      %v1164 = vadd.s32 %v1160, 1
      %v1165 = vsel %vm1163, %v1164, %v1160
      %v1166 = vadd.s32 %v1161, %v1165
      %v1167 = vadd.s32 %v1166, 536870912
      %v1168 = vshrl.u32 %v1167, 30
      %v1169 = vshll.u32 %v1168, 30
      %v1170 = vsub.s32 %v1166, %v1169
      %vm1171 = vcmp.lt.s32.totalorder %v1170, 0
      %v1172 = vsub.s32 0, %v1170
      %v1173 = vsel %vm1171, %v1172, %v1170
      %v1174 = vclz %v1173
      %v1175 = vsub.s32 %v1174, 2
      %vm1176 = vcmp.gt.s32.totalorder 0, %v1175
      %v1177 = vsel %vm1176, 0, %v1175
      %v1178 = vsub.s32 32, %v1177
      %v1179 = vshll.u32 %v1170, %v1177
      %v1180 = vshrl.u32 %v1162, %v1178
      %v1181 = vor.u32 %v1179, %v1180
      %v1182 = vsub.s32 4294967266, %v1177
      %v1183 = vadd.s32 %v1182, 127
      %v1184 = vshll.u32 %v1183, 23
      %v1185 = vor.u32 4788187, %v1184
      %v1186 = vand.u32 2147483647, %v1185
      %v1188 = vcvt.s32.f32 %v1181
      %v1189 = vmul.f32 %v1188, %v1186
      %v1190 = vxor.u32 %v1189, 2147483648
      %v1191 = vsel %vm1108, %v1190, %v1189
      %v1192 = vsub.s32 4, %v1168
      %v1193 = vsel %vm1108, %v1192, %v1168
      %v1194 = vsel %vm1107, %v158, %v1191
      %v1195 = vsel %vm1107, 0, %v1193
      %v1196 = vcosq.f32.pop %v1194
      %v1197 = vsinq.f32.pop %v1194
      %vm1198 = vweird.f32 %v158
      %v1199 = vand.u32 %v1195, 3
      %vm1200 = vcmp.lt.s32.totalorder %v1199, 2
      %vm1201 = vcmp.eq.s32.totalorder %v1199, 0
      %v1202 = vxor.u32 %v1197, 2147483648
      %v1203 = vsel %vm1201, %v1196, %v1202
      %vm1204 = vcmp.eq.s32.totalorder %v1199, 2
      %v1205 = vxor.u32 %v1196, 2147483648
      %v1206 = vsel %vm1204, %v1205, %v1197
      %v1207 = vsel %vm1200, %v1203, %v1206
      %v1208 = vsel %vm1198, nan, %v1207
      %v1209 = vand.u32 2147483647, %v159
      %vm1210 = vcmp.le.f32.partialorder %v1209, 0.7853982
      %vm1211 = vcmp.lt.s32.totalorder %v159, 0
      %v1212 = vand.u32 %v159, 2139095040
      %v1213 = vshrl.u32 %v1212, 23
      %v1214 = vsub.s32 %v1213, 127
      %v1215 = vand.u32 2147483647, %v159
      %v1216 = vand.u32 %v1215, 8388607
      %v1217 = vor.u32 %v1216, 8388608
      %v1218 = vsub.s32 0, %v1217
      %v1219 = vadd.s32 %v1214, 1
      %vm1220 = vcmp.gt.s32.totalorder %v1219, 0
      %v1221 = vsel %vm1220, %v1219, 0
      %v1222 = vshrl.u32 %v1221, 5
      %v1223 = vand.u32 %v1221, 31
      %v1224 = vsub.s32 32, %v1223
      %v1225 = vshrl.u32 683565275, %v1224
      %v1226 = vshll.u32 683565275, %v1223
      %v1227 = vshrl.u32 2475754826, %v1224
      %v1228 = vor.u32 %v1226, %v1227
      %v1229 = vshll.u32 2475754826, %v1223
      %v1230 = vshrl.u32 2131351028, %v1224
      %v1231 = vor.u32 %v1229, %v1230
      %v1232 = vshll.u32 2131351028, %v1223
      %v1233 = vshrl.u32 2102212464, %v1224
      %v1234 = vor.u32 %v1232, %v1233
      %v1235 = vshll.u32 2102212464, %v1223
      %v1236 = vshrl.u32 920167782, %v1224
      %v1237 = vor.u32 %v1235, %v1236
      %v1238 = vshll.u32 920167782, %v1223
      %v1239 = vshrl.u32 1326507024, %v1224
      %v1240 = vor.u32 %v1238, %v1239
      %vm1241 = vcmp.lt.s32.totalorder %v1222, 1
      %vm1242 = vcmp.lt.s32.totalorder %v1222, 2
      %vm1243 = vcmp.lt.s32.totalorder %v1222, 3
      %vm1244 = vcmp.lt.s32.totalorder %v1222, 4
      %v1245 = vsel %vm1241, %v1225, %v1228
      %v1246 = vsel %vm1244, %v1234, 2102212464
      %v1247 = vsel %vm1243, %v1231, %v1246
      %v1248 = vsel %vm1242, %v1245, %v1247
      %v1249 = vsel %vm1241, %v1228, %v1231
      %v1250 = vsel %vm1244, %v1237, 920167782
      %v1251 = vsel %vm1243, %v1234, %v1250
      %v1252 = vsel %vm1242, %v1249, %v1251
      %v1253 = vsel %vm1241, %v1231, %v1234
      %v1254 = vsel %vm1244, %v1240, 1326507024
      %v1255 = vsel %vm1243, %v1237, %v1254
      %v1256 = vsel %vm1242, %v1253, %v1255
      %v1257 = vshll.u32 %v1217, 8
      %v1258 = vmul.u32.u64.compose %v1257, %v1256
      %v1259 = vextract.low.u32 %v1258
      %v1260 = vextract.high.u32 %v1258
      %v1261 = vmul.u32.u64.compose %v1257, %v1252
      %v1262 = vextract.low.u32 %v1261
      %v1263 = vextract.high.u32 %v1261
      %v1264 = vmul.u32 %v1257, %v1248
      %v1265 = vadd.s32 %v1260, %v1262
      %vm1266 = vc.u32 %v1260, %v1262
      %v1267 = vadd.s32 %v1263, 1
      %v1268 = vsel %vm1266, %v1267, %v1263
      %v1269 = vadd.s32 %v1264, %v1268
      %v1270 = vadd.s32 %v1269, 536870912
      %v1271 = vshrl.u32 %v1270, 30
      %v1272 = vshll.u32 %v1271, 30
      %v1273 = vsub.s32 %v1269, %v1272
      %vm1274 = vcmp.lt.s32.totalorder %v1273, 0
      %v1275 = vsub.s32 0, %v1273
      %v1276 = vsel %vm1274, %v1275, %v1273
      %v1277 = vclz %v1276
      %v1278 = vsub.s32 %v1277, 2
      %vm1279 = vcmp.gt.s32.totalorder 0, %v1278
      %v1280 = vsel %vm1279, 0, %v1278
      %v1281 = vsub.s32 32, %v1280
      %v1282 = vshll.u32 %v1273, %v1280
      %v1283 = vshrl.u32 %v1265, %v1281
      %v1284 = vor.u32 %v1282, %v1283
      %v1285 = vsub.s32 4294967266, %v1280
      %v1286 = vadd.s32 %v1285, 127
      %v1287 = vshll.u32 %v1286, 23
      %v1288 = vor.u32 4788187, %v1287
      %v1289 = vand.u32 2147483647, %v1288
      %v1291 = vcvt.s32.f32 %v1284
      %v1292 = vmul.f32 %v1291, %v1289
      %v1293 = vxor.u32 %v1292, 2147483648
      %v1294 = vsel %vm1211, %v1293, %v1292
      %v1295 = vsub.s32 4, %v1271
      %v1296 = vsel %vm1211, %v1295, %v1271
      %v1297 = vsel %vm1210, %v159, %v1294
      %v1298 = vsel %vm1210, 0, %v1296
      %v1299 = vcosq.f32.pop %v1297
      %v1300 = vsinq.f32.pop %v1297
      %vm1301 = vweird.f32 %v159
      %v1302 = vand.u32 %v1298, 3
      %vm1303 = vcmp.lt.s32.totalorder %v1302, 2
      %vm1304 = vcmp.eq.s32.totalorder %v1302, 0
      %v1305 = vxor.u32 %v1300, 2147483648
      %v1306 = vsel %vm1304, %v1299, %v1305
      %vm1307 = vcmp.eq.s32.totalorder %v1302, 2
      %v1308 = vxor.u32 %v1299, 2147483648
      %v1309 = vsel %vm1307, %v1308, %v1300
      %v1310 = vsel %vm1303, %v1306, %v1309
      %v1311 = vsel %vm1301, nan, %v1310
      %v1312 = vand.u32 2147483647, %v160
      %vm1313 = vcmp.le.f32.partialorder %v1312, 0.7853982
      %vm1314 = vcmp.lt.s32.totalorder %v160, 0
      %v1315 = vand.u32 %v160, 2139095040
      %v1316 = vshrl.u32 %v1315, 23
      %v1317 = vsub.s32 %v1316, 127
      %v1318 = vand.u32 2147483647, %v160
      %v1319 = vand.u32 %v1318, 8388607
      %v1320 = vor.u32 %v1319, 8388608
      %v1321 = vsub.s32 0, %v1320
      %v1322 = vadd.s32 %v1317, 1
      %vm1323 = vcmp.gt.s32.totalorder %v1322, 0
      %v1324 = vsel %vm1323, %v1322, 0
      %v1325 = vshrl.u32 %v1324, 5
      %v1326 = vand.u32 %v1324, 31
      %v1327 = vsub.s32 32, %v1326
      %v1328 = vshrl.u32 683565275, %v1327
      %v1329 = vshll.u32 683565275, %v1326
      %v1330 = vshrl.u32 2475754826, %v1327
      %v1331 = vor.u32 %v1329, %v1330
      %v1332 = vshll.u32 2475754826, %v1326
      %v1333 = vshrl.u32 2131351028, %v1327
      %v1334 = vor.u32 %v1332, %v1333
      %v1335 = vshll.u32 2131351028, %v1326
      %v1336 = vshrl.u32 2102212464, %v1327
      %v1337 = vor.u32 %v1335, %v1336
      %v1338 = vshll.u32 2102212464, %v1326
      %v1339 = vshrl.u32 920167782, %v1327
      %v1340 = vor.u32 %v1338, %v1339
      %v1341 = vshll.u32 920167782, %v1326
      %v1342 = vshrl.u32 1326507024, %v1327
      %v1343 = vor.u32 %v1341, %v1342
      %vm1344 = vcmp.lt.s32.totalorder %v1325, 1
      %vm1345 = vcmp.lt.s32.totalorder %v1325, 2
      %vm1346 = vcmp.lt.s32.totalorder %v1325, 3
      %vm1347 = vcmp.lt.s32.totalorder %v1325, 4
      %v1348 = vsel %vm1344, %v1328, %v1331
      %v1349 = vsel %vm1347, %v1337, 2102212464
      %v1350 = vsel %vm1346, %v1334, %v1349
      %v1351 = vsel %vm1345, %v1348, %v1350
      %v1352 = vsel %vm1344, %v1331, %v1334
      %v1353 = vsel %vm1347, %v1340, 920167782
      %v1354 = vsel %vm1346, %v1337, %v1353
      %v1355 = vsel %vm1345, %v1352, %v1354
      %v1356 = vsel %vm1344, %v1334, %v1337
      %v1357 = vsel %vm1347, %v1343, 1326507024
      %v1358 = vsel %vm1346, %v1340, %v1357
      %v1359 = vsel %vm1345, %v1356, %v1358
      %v1360 = vshll.u32 %v1320, 8
      %v1361 = vmul.u32.u64.compose %v1360, %v1359
      %v1362 = vextract.low.u32 %v1361
      %v1363 = vextract.high.u32 %v1361
      %v1364 = vmul.u32.u64.compose %v1360, %v1355
      %v1365 = vextract.low.u32 %v1364
      %v1366 = vextract.high.u32 %v1364
      %v1367 = vmul.u32 %v1360, %v1351
      %v1368 = vadd.s32 %v1363, %v1365
      %vm1369 = vc.u32 %v1363, %v1365
      %v1370 = vadd.s32 %v1366, 1
      %v1371 = vsel %vm1369, %v1370, %v1366
      %v1372 = vadd.s32 %v1367, %v1371
      %v1373 = vadd.s32 %v1372, 536870912
      %v1374 = vshrl.u32 %v1373, 30
      %v1375 = vshll.u32 %v1374, 30
      %v1376 = vsub.s32 %v1372, %v1375
      %vm1377 = vcmp.lt.s32.totalorder %v1376, 0
      %v1378 = vsub.s32 0, %v1376
      %v1379 = vsel %vm1377, %v1378, %v1376
      %v1380 = vclz %v1379
      %v1381 = vsub.s32 %v1380, 2
      %vm1382 = vcmp.gt.s32.totalorder 0, %v1381
      %v1383 = vsel %vm1382, 0, %v1381
      %v1384 = vsub.s32 32, %v1383
      %v1385 = vshll.u32 %v1376, %v1383
      %v1386 = vshrl.u32 %v1368, %v1384
      %v1387 = vor.u32 %v1385, %v1386
      %v1388 = vsub.s32 4294967266, %v1383
      %v1389 = vadd.s32 %v1388, 127
      %v1390 = vshll.u32 %v1389, 23
      %v1391 = vor.u32 4788187, %v1390
      %v1392 = vand.u32 2147483647, %v1391
      %v1394 = vcvt.s32.f32 %v1387
      %v1395 = vmul.f32 %v1394, %v1392
      %v1396 = vxor.u32 %v1395, 2147483648
      %v1397 = vsel %vm1314, %v1396, %v1395
      %v1398 = vsub.s32 4, %v1374
      %v1399 = vsel %vm1314, %v1398, %v1374
      %v1400 = vsel %vm1313, %v160, %v1397
      %v1401 = vsel %vm1313, 0, %v1399
      %v1402 = vcosq.f32.pop %v1400
      %v1403 = vsinq.f32.pop %v1400
      %vm1404 = vweird.f32 %v160
      %v1405 = vand.u32 %v1401, 3
      %vm1406 = vcmp.lt.s32.totalorder %v1405, 2
      %vm1407 = vcmp.eq.s32.totalorder %v1405, 0
      %v1408 = vxor.u32 %v1403, 2147483648
      %v1409 = vsel %vm1407, %v1402, %v1408
      %vm1410 = vcmp.eq.s32.totalorder %v1405, 2
      %v1411 = vxor.u32 %v1402, 2147483648
      %v1412 = vsel %vm1410, %v1411, %v1403
      %v1413 = vsel %vm1406, %v1409, %v1412
      %v1414 = vsel %vm1404, nan, %v1413
      %v1415 = vand.u32 2147483647, %v34
      %vm1416 = vcmp.le.f32.partialorder %v1415, 0.7853982
      %vm1417 = vcmp.lt.s32.totalorder %v34, 0
      %v1418 = vand.u32 %v34, 2139095040
      %v1419 = vshrl.u32 %v1418, 23
      %v1420 = vsub.s32 %v1419, 127
      %v1421 = vand.u32 2147483647, %v34
      %v1422 = vand.u32 %v1421, 8388607
      %v1423 = vor.u32 %v1422, 8388608
      %v1424 = vsub.s32 0, %v1423
      %v1425 = vadd.s32 %v1420, 1
      %vm1426 = vcmp.gt.s32.totalorder %v1425, 0
      %v1427 = vsel %vm1426, %v1425, 0
      %v1428 = vshrl.u32 %v1427, 5
      %v1429 = vand.u32 %v1427, 31
      %v1430 = vsub.s32 32, %v1429
      %v1431 = vshrl.u32 683565275, %v1430
      %v1432 = vshll.u32 683565275, %v1429
      %v1433 = vshrl.u32 2475754826, %v1430
      %v1434 = vor.u32 %v1432, %v1433
      %v1435 = vshll.u32 2475754826, %v1429
      %v1436 = vshrl.u32 2131351028, %v1430
      %v1437 = vor.u32 %v1435, %v1436
      %v1438 = vshll.u32 2131351028, %v1429
      %v1439 = vshrl.u32 2102212464, %v1430
      %v1440 = vor.u32 %v1438, %v1439
      %v1441 = vshll.u32 2102212464, %v1429
      %v1442 = vshrl.u32 920167782, %v1430
      %v1443 = vor.u32 %v1441, %v1442
      %v1444 = vshll.u32 920167782, %v1429
      %v1445 = vshrl.u32 1326507024, %v1430
      %v1446 = vor.u32 %v1444, %v1445
      %vm1447 = vcmp.lt.s32.totalorder %v1428, 1
      %vm1448 = vcmp.lt.s32.totalorder %v1428, 2
      %vm1449 = vcmp.lt.s32.totalorder %v1428, 3
      %vm1450 = vcmp.lt.s32.totalorder %v1428, 4
      %v1451 = vsel %vm1447, %v1431, %v1434
      %v1452 = vsel %vm1450, %v1440, 2102212464
      %v1453 = vsel %vm1449, %v1437, %v1452
      %v1454 = vsel %vm1448, %v1451, %v1453
      %v1455 = vsel %vm1447, %v1434, %v1437
      %v1456 = vsel %vm1450, %v1443, 920167782
      %v1457 = vsel %vm1449, %v1440, %v1456
      %v1458 = vsel %vm1448, %v1455, %v1457
      %v1459 = vsel %vm1447, %v1437, %v1440
      %v1460 = vsel %vm1450, %v1446, 1326507024
      %v1461 = vsel %vm1449, %v1443, %v1460
      %v1462 = vsel %vm1448, %v1459, %v1461
      %v1463 = vshll.u32 %v1423, 8
      %v1464 = vmul.u32.u64.compose %v1463, %v1462
      %v1465 = vextract.low.u32 %v1464
      %v1466 = vextract.high.u32 %v1464
      %v1467 = vmul.u32.u64.compose %v1463, %v1458
      %v1468 = vextract.low.u32 %v1467
      %v1469 = vextract.high.u32 %v1467
      %v1470 = vmul.u32 %v1463, %v1454
      %v1471 = vadd.s32 %v1466, %v1468
      %vm1472 = vc.u32 %v1466, %v1468
      %v1473 = vadd.s32 %v1469, 1
      %v1474 = vsel %vm1472, %v1473, %v1469
      %v1475 = vadd.s32 %v1470, %v1474
      %v1476 = vadd.s32 %v1475, 536870912
      %v1477 = vshrl.u32 %v1476, 30
      %v1478 = vshll.u32 %v1477, 30
      %v1479 = vsub.s32 %v1475, %v1478
      %vm1480 = vcmp.lt.s32.totalorder %v1479, 0
      %v1481 = vsub.s32 0, %v1479
      %v1482 = vsel %vm1480, %v1481, %v1479
      %v1483 = vclz %v1482
      %v1484 = vsub.s32 %v1483, 2
      %vm1485 = vcmp.gt.s32.totalorder 0, %v1484
      %v1486 = vsel %vm1485, 0, %v1484
      %v1487 = vsub.s32 32, %v1486
      %v1488 = vshll.u32 %v1479, %v1486
      %v1489 = vshrl.u32 %v1471, %v1487
      %v1490 = vor.u32 %v1488, %v1489
      %v1491 = vsub.s32 4294967266, %v1486
      %v1492 = vadd.s32 %v1491, 127
      %v1493 = vshll.u32 %v1492, 23
      %v1494 = vor.u32 4788187, %v1493
      %v1495 = vand.u32 2147483647, %v1494
      %v1497 = vcvt.s32.f32 %v1490
      %v1498 = vmul.f32 %v1497, %v1495
      %v1499 = vxor.u32 %v1498, 2147483648
      %v1500 = vsel %vm1417, %v1499, %v1498
      %v1501 = vsub.s32 4, %v1477
      %v1502 = vsel %vm1417, %v1501, %v1477
      %v1503 = vsel %vm1416, %v34, %v1500
      %v1504 = vsel %vm1416, 0, %v1502
      %v1505 = vcosq.f32.pop %v1503
      %v1506 = vsinq.f32.pop %v1503
      %vm1507 = vweird.f32 %v34
      %v1508 = vand.u32 %v1504, 3
      %vm1509 = vcmp.lt.s32.totalorder %v1508, 2
      %vm1510 = vcmp.eq.s32.totalorder %v1508, 0
      %v1511 = vxor.u32 %v1506, 2147483648
      %v1512 = vsel %vm1510, %v1505, %v1511
      %vm1513 = vcmp.eq.s32.totalorder %v1508, 2
      %v1514 = vxor.u32 %v1505, 2147483648
      %v1515 = vsel %vm1513, %v1514, %v1506
      %v1516 = vsel %vm1509, %v1512, %v1515
      %v1517 = vsel %vm1507, nan, %v1516
      %v1518 = vmul.f32 %v276, %v162
      %v1519 = vmul.f32 %v380, %v164
      %v1520 = vmul.f32 %v484, %v166
      %v1521 = vmul.f32 %v588, %v168
      %v1522 = vmul.f32 %v692, %v170
      %v1523 = vmul.f32 %v796, %v172
      %v1524 = vsub.f32 %v1518, %v899
      %v1525 = vsub.f32 %v1519, %v1002
      %v1526 = vsub.f32 %v1520, %v1105
      %v1527 = vsub.f32 %v1521, %v1208
      %v1528 = vsub.f32 %v1522, %v1311
      %v1529 = vsub.f32 %v1523, %v1414
      %v1530 = vmul.f32 %v1524, %v162
      %v1531 = vmul.f32 %v1525, %v164
      %v1532 = vmul.f32 %v1526, %v166
      %v1533 = vmul.f32 %v1527, %v168
      %v1534 = vmul.f32 %v1528, %v170
      %v1535 = vmul.f32 %v1529, %v172
      %vm1536 = vcmp.eq.f32.partialorder %v44, 1.0
      %vm1537 = vcmp.eq.f32.partialorder %v49, 1.0
      %vm1538 = vcmp.eq.f32.partialorder %v54, 1.0
      %vm1539 = vcmp.eq.f32.partialorder %v59, 1.0
      %vm1540 = vcmp.eq.f32.partialorder %v64, 1.0
      %vm1541 = vcmp.eq.f32.partialorder %v69, 1.0
      %v1542 = vsel %vm1536, %v1530, %v1518
      %v1543 = vsel %vm1537, %v1531, %v1519
      %v1544 = vsel %vm1538, %v1532, %v1520
      %v1545 = vsel %vm1539, %v1533, %v1521
      %v1546 = vsel %vm1540, %v1534, %v1522
      %v1547 = vsel %vm1541, %v1535, %v1523
      %v1549 = vlaneseq
      %v1550 = vshrl.u32 %v1549, 7
      %v1551 = vsub.s32 0, %v1550
      %v1552 = vrot.slane %v1517, %v1551
      %v1554 = vmul.f32 %v80, %v1552
      %v1555 = vmul.f32 %v85, %v1552
      %v1556 = vmul.f32 %v90, %v1552
      %v1557 = vmul.f32 %v95, %v1552
      %v1558 = vmul.f32 %v100, %v1552
      %v1559 = vmul.f32 %v105, %v1552
      %v1560 = vsel %vm1536, %v1554, %v80
      %v1561 = vsel %vm1537, %v1555, %v85
      %v1562 = vsel %vm1538, %v1556, %v90
      %v1563 = vsel %vm1539, %v1557, %v95
      %v1564 = vsel %vm1540, %v1558, %v100
      %v1565 = vsel %vm1541, %v1559, %v105
      %v1566 = vmul.f32 %v162, 3.0
      %v1567 = vmul.f32 %v164, 3.0
      %v1568 = vmul.f32 %v166, 3.0
      %v1569 = vmul.f32 %v168, 3.0
      %v1570 = vmul.f32 %v170, 3.0
      %v1571 = vmul.f32 %v172, 3.0
      %v1572 = vmul.f32 %v1566, %v1530
      %v1573 = vmul.f32 %v1567, %v1531
      %v1574 = vmul.f32 %v1568, %v1532
      %v1575 = vmul.f32 %v1569, %v1533
      %v1576 = vmul.f32 %v1570, %v1534
      %v1577 = vmul.f32 %v1571, %v1535
      %v1578 = vsub.f32 %v1572, %v1518
      %v1579 = vsub.f32 %v1573, %v1519
      %v1580 = vsub.f32 %v1574, %v1520
      %v1581 = vsub.f32 %v1575, %v1521
      %v1582 = vsub.f32 %v1576, %v1522
      %v1583 = vsub.f32 %v1577, %v1523
      %v1584 = vmul.f32 %v1517, 3.0
      %v1585 = vmul.f32 %v1584, %v1517
      %v1586 = vsub.f32 %v1585, 1.0
      %v1587 = vmul.f32 %v1586, 0.5
      %vm1588 = vcmp.eq.f32.partialorder %v44, 2.0
      %vm1589 = vcmp.eq.f32.partialorder %v49, 2.0
      %vm1590 = vcmp.eq.f32.partialorder %v54, 2.0
      %vm1591 = vcmp.eq.f32.partialorder %v59, 2.0
      %vm1592 = vcmp.eq.f32.partialorder %v64, 2.0
      %vm1593 = vcmp.eq.f32.partialorder %v69, 2.0
      %v1594 = vsel %vm1588, %v1578, %v1542
      %v1595 = vsel %vm1589, %v1579, %v1543
      %v1596 = vsel %vm1590, %v1580, %v1544
      %v1597 = vsel %vm1591, %v1581, %v1545
      %v1598 = vsel %vm1592, %v1582, %v1546
      %v1599 = vsel %vm1593, %v1583, %v1547
      %v1601 = vlaneseq
      %v1602 = vshrl.u32 %v1601, 7
      %v1603 = vsub.s32 0, %v1602
      %v1604 = vrot.slane %v1587, %v1603
      %v1606 = vmul.f32 %v80, %v1604
      %v1607 = vmul.f32 %v85, %v1604
      %v1608 = vmul.f32 %v90, %v1604
      %v1609 = vmul.f32 %v95, %v1604
      %v1610 = vmul.f32 %v100, %v1604
      %v1611 = vmul.f32 %v105, %v1604
      %v1612 = vsel %vm1588, %v1606, %v1560
      %v1613 = vsel %vm1589, %v1607, %v1561
      %v1614 = vsel %vm1590, %v1608, %v1562
      %v1615 = vsel %vm1591, %v1609, %v1563
      %v1616 = vsel %vm1592, %v1610, %v1564
      %v1617 = vsel %vm1593, %v1611, %v1565
      %v1618 = vmul.f32 %v162, 5.0
      %v1619 = vmul.f32 %v164, 5.0
      %v1620 = vmul.f32 %v166, 5.0
      %v1621 = vmul.f32 %v168, 5.0
      %v1622 = vmul.f32 %v170, 5.0
      %v1623 = vmul.f32 %v172, 5.0
      %v1624 = vmul.f32 %v1618, %v1578
      %v1625 = vmul.f32 %v1619, %v1579
      %v1626 = vmul.f32 %v1620, %v1580
      %v1627 = vmul.f32 %v1621, %v1581
      %v1628 = vmul.f32 %v1622, %v1582
      %v1629 = vmul.f32 %v1623, %v1583
      %v1630 = vsub.f32 %v1624, %v1530
      %v1631 = vsub.f32 %v1625, %v1531
      %v1632 = vsub.f32 %v1626, %v1532
      %v1633 = vsub.f32 %v1627, %v1533
      %v1634 = vsub.f32 %v1628, %v1534
      %v1635 = vsub.f32 %v1629, %v1535
      %v1636 = vmul.f32 %v1517, 5.0
      %v1637 = vmul.f32 %v1636, %v1587
      %v1638 = vmul.f32 %v1517, 2.0
      %v1639 = vsub.f32 %v1637, %v1638
      %v1640 = vmul.f32 %v1639, 0.33333334
      %vm1641 = vcmp.eq.f32.partialorder %v44, 3.0
      %vm1642 = vcmp.eq.f32.partialorder %v49, 3.0
      %vm1643 = vcmp.eq.f32.partialorder %v54, 3.0
      %vm1644 = vcmp.eq.f32.partialorder %v59, 3.0
      %vm1645 = vcmp.eq.f32.partialorder %v64, 3.0
      %vm1646 = vcmp.eq.f32.partialorder %v69, 3.0
      %v1647 = vsel %vm1641, %v1630, %v1594
      %v1648 = vsel %vm1642, %v1631, %v1595
      %v1649 = vsel %vm1643, %v1632, %v1596
      %v1650 = vsel %vm1644, %v1633, %v1597
      %v1651 = vsel %vm1645, %v1634, %v1598
      %v1652 = vsel %vm1646, %v1635, %v1599
      %v1654 = vlaneseq
      %v1655 = vshrl.u32 %v1654, 7
      %v1656 = vsub.s32 0, %v1655
      %v1657 = vrot.slane %v1640, %v1656
      %v1659 = vmul.f32 %v80, %v1657
      %v1660 = vmul.f32 %v85, %v1657
      %v1661 = vmul.f32 %v90, %v1657
      %v1662 = vmul.f32 %v95, %v1657
      %v1663 = vmul.f32 %v100, %v1657
      %v1664 = vmul.f32 %v105, %v1657
      %v1665 = vsel %vm1641, %v1659, %v1612
      %v1666 = vsel %vm1642, %v1660, %v1613
      %v1667 = vsel %vm1643, %v1661, %v1614
      %v1668 = vsel %vm1644, %v1662, %v1615
      %v1669 = vsel %vm1645, %v1663, %v1616
      %v1670 = vsel %vm1646, %v1664, %v1617
      %v1671 = vmul.f32 %v162, 7.0
      %v1672 = vmul.f32 %v164, 7.0
      %v1673 = vmul.f32 %v166, 7.0
      %v1674 = vmul.f32 %v168, 7.0
      %v1675 = vmul.f32 %v170, 7.0
      %v1676 = vmul.f32 %v172, 7.0
      %v1677 = vmul.f32 %v1671, %v1630
      %v1678 = vmul.f32 %v1672, %v1631
      %v1679 = vmul.f32 %v1673, %v1632
      %v1680 = vmul.f32 %v1674, %v1633
      %v1681 = vmul.f32 %v1675, %v1634
      %v1682 = vmul.f32 %v1676, %v1635
      %v1683 = vsub.f32 %v1677, %v1578
      %v1684 = vsub.f32 %v1678, %v1579
      %v1685 = vsub.f32 %v1679, %v1580
      %v1686 = vsub.f32 %v1680, %v1581
      %v1687 = vsub.f32 %v1681, %v1582
      %v1688 = vsub.f32 %v1682, %v1583
      %v1689 = vmul.f32 %v1517, 7.0
      %v1690 = vmul.f32 %v1689, %v1640
      %v1691 = vmul.f32 %v1587, 3.0
      %v1692 = vsub.f32 %v1690, %v1691
      %v1693 = vmul.f32 %v1692, 0.25
      %vm1694 = vcmp.eq.f32.partialorder %v44, 4.0
      %vm1695 = vcmp.eq.f32.partialorder %v49, 4.0
      %vm1696 = vcmp.eq.f32.partialorder %v54, 4.0
      %vm1697 = vcmp.eq.f32.partialorder %v59, 4.0
      %vm1698 = vcmp.eq.f32.partialorder %v64, 4.0
      %vm1699 = vcmp.eq.f32.partialorder %v69, 4.0
      %v1700 = vsel %vm1694, %v1683, %v1647
      %v1701 = vsel %vm1695, %v1684, %v1648
      %v1702 = vsel %vm1696, %v1685, %v1649
      %v1703 = vsel %vm1697, %v1686, %v1650
      %v1704 = vsel %vm1698, %v1687, %v1651
      %v1705 = vsel %vm1699, %v1688, %v1652
      %v1707 = vlaneseq
      %v1708 = vshrl.u32 %v1707, 7
      %v1709 = vsub.s32 0, %v1708
      %v1710 = vrot.slane %v1693, %v1709
      %v1712 = vmul.f32 %v80, %v1710
      %v1713 = vmul.f32 %v85, %v1710
      %v1714 = vmul.f32 %v90, %v1710
      %v1715 = vmul.f32 %v95, %v1710
      %v1716 = vmul.f32 %v100, %v1710
      %v1717 = vmul.f32 %v105, %v1710
      %v1718 = vsel %vm1694, %v1712, %v1665
      %v1719 = vsel %vm1695, %v1713, %v1666
      %v1720 = vsel %vm1696, %v1714, %v1667
      %v1721 = vsel %vm1697, %v1715, %v1668
      %v1722 = vsel %vm1698, %v1716, %v1669
      %v1723 = vsel %vm1699, %v1717, %v1670
      %v1724 = vmul.f32 %v162, 9.0
      %v1725 = vmul.f32 %v164, 9.0
      %v1726 = vmul.f32 %v166, 9.0
      %v1727 = vmul.f32 %v168, 9.0
      %v1728 = vmul.f32 %v170, 9.0
      %v1729 = vmul.f32 %v172, 9.0
      %v1730 = vmul.f32 %v1724, %v1683
      %v1731 = vmul.f32 %v1725, %v1684
      %v1732 = vmul.f32 %v1726, %v1685
      %v1733 = vmul.f32 %v1727, %v1686
      %v1734 = vmul.f32 %v1728, %v1687
      %v1735 = vmul.f32 %v1729, %v1688
      %v1736 = vsub.f32 %v1730, %v1630
      %v1737 = vsub.f32 %v1731, %v1631
      %v1738 = vsub.f32 %v1732, %v1632
      %v1739 = vsub.f32 %v1733, %v1633
      %v1740 = vsub.f32 %v1734, %v1634
      %v1741 = vsub.f32 %v1735, %v1635
      %v1742 = vmul.f32 %v1517, 9.0
      %v1743 = vmul.f32 %v1742, %v1693
      %v1744 = vmul.f32 %v1640, 4.0
      %v1745 = vsub.f32 %v1743, %v1744
      %v1746 = vmul.f32 %v1745, 0.2
      %vm1747 = vcmp.eq.f32.partialorder %v44, 5.0
      %vm1748 = vcmp.eq.f32.partialorder %v49, 5.0
      %vm1749 = vcmp.eq.f32.partialorder %v54, 5.0
      %vm1750 = vcmp.eq.f32.partialorder %v59, 5.0
      %vm1751 = vcmp.eq.f32.partialorder %v64, 5.0
      %vm1752 = vcmp.eq.f32.partialorder %v69, 5.0
      %v1753 = vsel %vm1747, %v1736, %v1700
      %v1754 = vsel %vm1748, %v1737, %v1701
      %v1755 = vsel %vm1749, %v1738, %v1702
      %v1756 = vsel %vm1750, %v1739, %v1703
      %v1757 = vsel %vm1751, %v1740, %v1704
      %v1758 = vsel %vm1752, %v1741, %v1705
      %v1760 = vlaneseq
      %v1761 = vshrl.u32 %v1760, 7
      %v1762 = vsub.s32 0, %v1761
      %v1763 = vrot.slane %v1746, %v1762
      %v1765 = vmul.f32 %v80, %v1763
      %v1766 = vmul.f32 %v85, %v1763
      %v1767 = vmul.f32 %v90, %v1763
      %v1768 = vmul.f32 %v95, %v1763
      %v1769 = vmul.f32 %v100, %v1763
      %v1770 = vmul.f32 %v105, %v1763
      %v1771 = vsel %vm1747, %v1765, %v1718
      %v1772 = vsel %vm1748, %v1766, %v1719
      %v1773 = vsel %vm1749, %v1767, %v1720
      %v1774 = vsel %vm1750, %v1768, %v1721
      %v1775 = vsel %vm1751, %v1769, %v1722
      %v1776 = vsel %vm1752, %v1770, %v1723
      %v1777 = vmul.f32 %v162, 11.0
      %v1778 = vmul.f32 %v164, 11.0
      %v1779 = vmul.f32 %v166, 11.0
      %v1780 = vmul.f32 %v168, 11.0
      %v1781 = vmul.f32 %v170, 11.0
      %v1782 = vmul.f32 %v172, 11.0
      %v1783 = vmul.f32 %v1777, %v1736
      %v1784 = vmul.f32 %v1778, %v1737
      %v1785 = vmul.f32 %v1779, %v1738
      %v1786 = vmul.f32 %v1780, %v1739
      %v1787 = vmul.f32 %v1781, %v1740
      %v1788 = vmul.f32 %v1782, %v1741
      %v1789 = vsub.f32 %v1783, %v1683
      %v1790 = vsub.f32 %v1784, %v1684
      %v1791 = vsub.f32 %v1785, %v1685
      %v1792 = vsub.f32 %v1786, %v1686
      %v1793 = vsub.f32 %v1787, %v1687
      %v1794 = vsub.f32 %v1788, %v1688
      %v1795 = vmul.f32 %v1517, 11.0
      %v1796 = vmul.f32 %v1795, %v1746
      %v1797 = vmul.f32 %v1693, 5.0
      %v1798 = vsub.f32 %v1796, %v1797
      %v1799 = vmul.f32 %v1798, 0.16666667
      %vm1800 = vcmp.eq.f32.partialorder %v44, 6.0
      %vm1801 = vcmp.eq.f32.partialorder %v49, 6.0
      %vm1802 = vcmp.eq.f32.partialorder %v54, 6.0
      %vm1803 = vcmp.eq.f32.partialorder %v59, 6.0
      %vm1804 = vcmp.eq.f32.partialorder %v64, 6.0
      %vm1805 = vcmp.eq.f32.partialorder %v69, 6.0
      %v1806 = vsel %vm1800, %v1789, %v1753
      %v1807 = vsel %vm1801, %v1790, %v1754
      %v1808 = vsel %vm1802, %v1791, %v1755
      %v1809 = vsel %vm1803, %v1792, %v1756
      %v1810 = vsel %vm1804, %v1793, %v1757
      %v1811 = vsel %vm1805, %v1794, %v1758
      %v1813 = vlaneseq
      %v1814 = vshrl.u32 %v1813, 7
      %v1815 = vsub.s32 0, %v1814
      %v1816 = vrot.slane %v1799, %v1815
      %v1818 = vmul.f32 %v80, %v1816
      %v1819 = vmul.f32 %v85, %v1816
      %v1820 = vmul.f32 %v90, %v1816
      %v1821 = vmul.f32 %v95, %v1816
      %v1822 = vmul.f32 %v100, %v1816
      %v1823 = vmul.f32 %v105, %v1816
      %v1824 = vsel %vm1800, %v1818, %v1771
      %v1825 = vsel %vm1801, %v1819, %v1772
      %v1826 = vsel %vm1802, %v1820, %v1773
      %v1827 = vsel %vm1803, %v1821, %v1774
      %v1828 = vsel %vm1804, %v1822, %v1775
      %v1829 = vsel %vm1805, %v1823, %v1776
      %v1830 = vmul.f32 %v1806, %v1824
      %v1831 = vmul.f32 %v1807, %v1825
      %v1832 = vmul.f32 %v1808, %v1826
      %v1833 = vmul.f32 %v1809, %v1827
      %v1834 = vmul.f32 %v1810, %v1828
      %v1835 = vmul.f32 %v1811, %v1829
      %s1836 = smul.addr %s28, 8
      %s1837 = scalar_lea.vmem [#allocation2], %s1836
      %1838 = vst [vmem:[%s1837] sm:$0xff] %v1830
      %1839 = vst [vmem:[%s1837 + $0x10] sm:$0xff] %v1831
      %1840 = vst [vmem:[%s1837 + $0x20] sm:$0xff] %v1832
      %1841 = vst [vmem:[%s1837 + $0x30] sm:$0xff] %v1833
      %1842 = vst [vmem:[%s1837 + $0x40] sm:$0xff] %v1834
      %1843 = vst [vmem:[%s1837 + $0x50] sm:$0xff] %v1835
    $region26: #{tpu_custom_call.1} parent=1 // loop_footer
      %s26 = sadd.s32 1, %s22
    $region27: #{tpu_custom_call.1} parent=1 // loop_footer_branch
      %21 = sbr.rel target = $region23
    $region28: #{tpu_custom_call.1} parent=1 // loop_exit
      _
    // Predicated region
    $region29: #{tpu_custom_call.1} parent=1 // pred_check
      _
    $region30: #{tpu_custom_call.1} parent=1 // pred_check_branch
      %1845 = sbr.rel (0) target = $region32
    $region31: #{tpu_custom_call.1} parent=1 // pred_region
      %s1847 = ssub.s32 1536, 1536
      %1848 = vsyncadd [#allocation3], %s1847
      %s1849 = sshll.u32 [#allocation2], 4
      %s1850 = int_to_ptr.vmem [resolvable:$true] %s1849
      %1855 = dma.vmem_to_hbm [thread:$0]  %s1850, 1536, %s5, [#allocation3], 256, 256, 16
    $region32: #{tpu_custom_call.1} parent=1 // pred_fallthru
      _
    // Predicated region
    $region33: #{tpu_custom_call.1} parent=1 // pred_check
      _
    $region34: #{tpu_custom_call.1} parent=1 // pred_check_branch
      %1857 = sbr.rel (0) target = $region36
    $region35: #{tpu_custom_call.1} parent=1 // pred_region
      %1858 = dma.done [#allocation3], 1536
    $region36: #{tpu_custom_call.1} parent=1 // pred_fallthru
      _
    %1859 = vsyncpa [#allocation3], 1

</llo_original>
